<compile_context>
chip_gen: v7x
topology: tpu7x:2x2x1
jax: 0.10.0
libtpu: 0.0.40
codegen_flags: <defaults>
</compile_context>

<pallas_src>
import math

import jax
import jax.numpy as jnp
from jax import lax
from jax.experimental import pallas as pl
from jax.experimental.pallas import tpu as pltpu

# ----------------------------- small config ---------------------------------
BATCH = 2
SEQ = 8            # multiple of 8 -> sublane-aligned
EMBED = 32         # embedding_dimension
HEADS = 4          # msa heads
HEAD_DIM = EMBED // HEADS
MLP = 64           # mlp_units
LN_EPS = 1e-5      # nn.LayerNorm default


def _normalize(x):
    """LayerNorm WITHOUT affine (gamma/beta folded into downstream weights)."""
    mu = jnp.mean(x, axis=-1, keepdims=True)
    var = jnp.mean((x - mu) ** 2, axis=-1, keepdims=True)
    return (x - mu) * lax.rsqrt(var + LN_EPS)


# ------------------------ fused encoder-block kernel ------------------------
def encoder_block_kernel(x_ref,
                         wqkv_ref, bqkv_ref, wo_ref, bo_ref,
                         w1_ref, b1_ref, w2_ref, b2_ref,
                         o_ref):
    x = x_ref[0]                                              # (S, D) f32

    # ---- MSA: pre-LN (affine folded into W_qkv) -> attention -> residual --
    xn = _normalize(x).astype(jnp.bfloat16)                   # (S, D) bf16
    xb = jnp.broadcast_to(xn, (3 * HEADS,) + xn.shape)        # (3H, S, D)
    # One batched einsum gives q/k/v for every head; 1/sqrt(Dh) already folded
    # into the q slice of wqkv/bqkv host-side.
    qkvh = jnp.einsum('hsd,hde->hse', xb, wqkv_ref[...],
                      preferred_element_type=jnp.float32) + bqkv_ref[...]
    q = qkvh[0:HEADS].astype(jnp.bfloat16)                    # (H, S, Dh)
    k = qkvh[HEADS:2 * HEADS].astype(jnp.bfloat16)
    v = qkvh[2 * HEADS:3 * HEADS].astype(jnp.bfloat16)

    s = jnp.einsum('hqd,hkd->hqk', q, k,
                   preferred_element_type=jnp.float32)        # (H, S, S) f32
    s = s - jnp.max(s, axis=-1, keepdims=True)
    p = jnp.exp(s)
    p = p * pl.reciprocal(jnp.sum(p, axis=-1, keepdims=True), approx=True)
    ah = jnp.einsum('hqk,hkd->hqd', p.astype(jnp.bfloat16), v,
                    preferred_element_type=jnp.float32)       # (H, S, Dh)

    # Per-head output projection summed over heads == concat_heads @ W_out.
    attn = jnp.sum(
        jnp.einsum('hsd,hde->hse', ah.astype(jnp.bfloat16), wo_ref[...],
                   preferred_element_type=jnp.float32),
        axis=0) + bo_ref[...]                                 # (S, D)
    x = x + attn                                              # residual (f32)

    # ---- MLP: pre-LN (affine folded into W_fc1) -> GELU -> fc2 -> residual -
    xn2 = _normalize(x).astype(jnp.bfloat16)
    h1 = jnp.dot(xn2, w1_ref[...],
                 preferred_element_type=jnp.float32) + b1_ref[...]
    h1 = 0.5 * h1 * (1.0 + lax.erf(h1 * (1.0 / math.sqrt(2.0))))  # exact GELU
    # TODO(synk): nn.Dropout layers are identity in eval mode; no RNG needed.
    h2 = jnp.dot(h1.astype(jnp.bfloat16), w2_ref[...],
                 preferred_element_type=jnp.float32) + b2_ref[...]
    o_ref[0] = x + h2                                         # residual (f32)


def _resident_spec(arr):
    # Whole array resident in VMEM; constant block index -> DMA'd once.
    nd = arr.ndim
    return pl.BlockSpec(arr.shape, lambda b, _nd=nd: (0,) * _nd)


def transformer_encoder_block(x, params):
    """Forward of TransformerEncoderBlock. x: (B, S, D) f32."""
    B, S, D = x.shape
    assert D == EMBED and S == SEQ

    # ---------------- host-side weight prep (f32 folding, then bf16) --------
    # LN1 affine folded into the qkv projection:
    #   LN(x) @ W + b == xhat @ (diag(g) W) + (beta @ W + b)
    g1 = params['ln1_w'].reshape(D)
    be1 = params['ln1_b'].reshape(D)
    wqkv = params['w_qkv'] * g1[:, None]                       # (D, 3D)
    bqkv = params['b_qkv'].reshape(3 * D) + be1 @ params['w_qkv']

    # Fold the 1/sqrt(head_dim) attention scale into the q block (PyTorch
    # scales q *after* its bias, so scaling both Wq and bq is exact).
    scale = jnp.concatenate([
        jnp.full((D,), 1.0 / math.sqrt(HEAD_DIM), jnp.float32),
        jnp.ones((2 * D,), jnp.float32)])
    wqkv = wqkv * scale[None, :]
    bqkv = bqkv * scale

    # Per-head stacks: (3H, D, Dh) weights, (3H, 1, Dh) bias.
    wqkv_h = (wqkv.reshape(D, 3, HEADS, HEAD_DIM)
                  .transpose(1, 2, 0, 3)
                  .reshape(3 * HEADS, D, HEAD_DIM)
                  .astype(jnp.bfloat16))
    bqkv_h = bqkv.reshape(3 * HEADS, 1, HEAD_DIM)

    wo_h = params['w_out'].reshape(HEADS, HEAD_DIM, D).astype(jnp.bfloat16)

    # LN2 affine folded into fc1.
    g2 = params['ln2_w'].reshape(D)
    be2 = params['ln2_b'].reshape(D)
    w1 = (params['w_fc1'] * g2[:, None]).astype(jnp.bfloat16)
    b1 = (params['b_fc1'].reshape(MLP) + be2 @ params['w_fc1']).reshape(1, MLP)
    w2 = params['w_fc2'].astype(jnp.bfloat16)

    operands = (x,
                wqkv_h, bqkv_h, wo_h, params['b_out'],
                w1, b1, w2, params['b_fc2'])

    in_specs = [pl.BlockSpec((1, S, D), lambda b: (b, 0, 0))]
    in_specs += [_resident_spec(a) for a in operands[1:]]

    return pl.pallas_call(
        encoder_block_kernel,
        out_shape=jax.ShapeDtypeStruct((B, S, D), jnp.float32),
        grid=(B,),
        in_specs=in_specs,
        out_specs=pl.BlockSpec((1, S, D), lambda b: (b, 0, 0)),
        compiler_params=pltpu.CompilerParams(
            dimension_semantics=("parallel",)),   # 2 TCs on v7x
    )(*operands)


# --------------------------- parameters & reference -------------------------
def init_params(key):
    def nrm(k, shape, scale=0.02):
        return jax.random.normal(k, shape, dtype=jnp.float32) * scale

    ks = iter(jax.random.split(key, 12))
    return {
        # non-trivial LN affine so the host-side folding is actually exercised
        'ln1_w': 1.0 + nrm(next(ks), (1, EMBED), 0.1),
        'ln1_b': nrm(next(ks), (1, EMBED), 0.1),
        # in_proj: PyTorch stores (3D, D); kept as (D, 3D) so x @ W == x @ W_pt.T
        'w_qkv': nrm(next(ks), (EMBED, 3 * EMBED)),
        'b_qkv': nrm(next(ks), (1, 3 * EMBED)),
        'w_out': nrm(next(ks), (EMBED, EMBED)),
        'b_out': nrm(next(ks), (1, EMBED)),
        'ln2_w': 1.0 + nrm(next(ks), (1, EMBED), 0.1),
        'ln2_b': nrm(next(ks), (1, EMBED), 0.1),
        'w_fc1': nrm(next(ks), (EMBED, MLP)),
        'b_fc1': nrm(next(ks), (1, MLP)),
        'w_fc2': nrm(next(ks), (MLP, EMBED)),
        'b_fc2': nrm(next(ks), (1, EMBED)),
    }


def reference_block(x, p):
    """Pure-JAX f32 reference (PyTorch eval semantics) for validation."""
    def ln(z, w, b):
        mu = z.mean(-1, keepdims=True)
        var = ((z - mu) ** 2).mean(-1, keepdims=True)
        return (z - mu) / jnp.sqrt(var + LN_EPS) * w + b

    xn = ln(x, p['ln1_w'], p['ln1_b'])
    qkv = xn @ p['w_qkv'] + p['b_qkv']
    q, k, v = jnp.split(qkv, 3, axis=-1)

    def heads(z):
        B, S, _ = z.shape
        return z.reshape(B, S, HEADS, HEAD_DIM).transpose(0, 2, 1, 3)

    qh, kh, vh = heads(q), heads(k), heads(v)
    s = jnp.einsum('bhqd,bhkd->bhqk', qh, kh) / math.sqrt(HEAD_DIM)
    pr = jax.nn.softmax(s, axis=-1)
    ah = jnp.einsum('bhqk,bhkd->bhqd', pr, vh)
    ao = ah.transpose(0, 2, 1, 3).reshape(x.shape)
    x = x + (ao @ p['w_out'] + p['b_out'])

    xn = ln(x, p['ln2_w'], p['ln2_b'])
    h1 = xn @ p['w_fc1'] + p['b_fc1']
    h1 = 0.5 * h1 * (1.0 + lax.erf(h1 / math.sqrt(2.0)))
    h2 = h1 @ p['w_fc2'] + p['b_fc2']
    return x + h2


# ---------------------------------- main -------------------------------------
if __name__ == "__main__":
    key = jax.random.PRNGKey(0)
    k_x, k_p = jax.random.split(key)
    x = jax.random.normal(k_x, (BATCH, SEQ, EMBED), dtype=jnp.float32)
    params = init_params(k_p)

    out = jax.jit(transformer_encoder_block)(x, params)
    jax.block_until_ready(out)

    assert out.shape == (BATCH, SEQ, EMBED)
    ref = reference_block(x, params)
    max_err = float(jnp.max(jnp.abs(out - ref)))
    assert jnp.all(jnp.isfinite(out))
    assert max_err < 5e-2, f"mismatch vs reference: {max_err}"
    print("KERNEL_OK")
</pallas_src>

<mosaic_0001>
module attributes {stable_mosaic.version = 11 : i64} {
  func.func @encoder_block_kernel(%arg0: i32, %arg1: memref<1x8x32xf32, #tpu.memory_space<vmem>>, %arg2: memref<12x32x8xbf16, #tpu.memory_space<vmem>>, %arg3: memref<12x1x8xf32, #tpu.memory_space<vmem>>, %arg4: memref<4x8x32xbf16, #tpu.memory_space<vmem>>, %arg5: memref<1x32xf32, #tpu.memory_space<vmem>>, %arg6: memref<32x64xbf16, #tpu.memory_space<vmem>>, %arg7: memref<1x64xf32, #tpu.memory_space<vmem>>, %arg8: memref<64x32xbf16, #tpu.memory_space<vmem>>, %arg9: memref<1x32xf32, #tpu.memory_space<vmem>>, %arg10: memref<1x8x32xf32, #tpu.memory_space<vmem>>) attributes {dimension_semantics = [#tpu.dimension_semantics<parallel>], iteration_bounds = array<i64: 2>, scalar_prefetch = 0 : i64, scratch_operands = 0 : i64, tpu.core_type = #tpu.core_type<tc>, window_params = [{transform_indices = @transform_0, window_bounds = array<i64: 1, 8, 32>}, {pipeline_mode = #tpu.pipeline_mode<synchronous>, transform_indices = @transform_1, window_bounds = array<i64: 12, 32, 8>}, {pipeline_mode = #tpu.pipeline_mode<synchronous>, transform_indices = @transform_2, window_bounds = array<i64: 12, 1, 8>}, {pipeline_mode = #tpu.pipeline_mode<synchronous>, transform_indices = @transform_3, window_bounds = array<i64: 4, 8, 32>}, {pipeline_mode = #tpu.pipeline_mode<synchronous>, transform_indices = @transform_4, window_bounds = array<i64: 1, 32>}, {pipeline_mode = #tpu.pipeline_mode<synchronous>, transform_indices = @transform_5, window_bounds = array<i64: 32, 64>}, {pipeline_mode = #tpu.pipeline_mode<synchronous>, transform_indices = @transform_6, window_bounds = array<i64: 1, 64>}, {pipeline_mode = #tpu.pipeline_mode<synchronous>, transform_indices = @transform_7, window_bounds = array<i64: 64, 32>}, {pipeline_mode = #tpu.pipeline_mode<synchronous>, transform_indices = @transform_8, window_bounds = array<i64: 1, 32>}, {transform_indices = @transform_9, window_bounds = array<i64: 1, 8, 32>}]} {
    %c0 = arith.constant 0 : index
    %c0_0 = arith.constant 0 : index
    %c0_1 = arith.constant 0 : index
    %0 = vector.load %arg1[%c0, %c0_0, %c0_1] : memref<1x8x32xf32, #tpu.memory_space<vmem>>, vector<1x8x32xf32>
    %1 = vector.shape_cast %0 : vector<1x8x32xf32> to vector<8x32xf32>
    %cst = arith.constant dense<0.000000e+00> : vector<8xf32>
    %2 = vector.multi_reduction <add>, %1, %cst [1] : vector<8x32xf32> to vector<8xf32>
    %3 = vector.shape_cast %2 : vector<8xf32> to vector<8x1xf32>
    %cst_2 = arith.constant 3.200000e+01 : f32
    %4 = vector.broadcast %cst_2 : f32 to vector<8x1xf32>
    %5 = arith.divf %3, %4 : vector<8x1xf32>
    %6 = vector.broadcast %5 : vector<8x1xf32> to vector<8x32xf32>
    %7 = arith.subf %1, %6 : vector<8x32xf32>
    %8 = arith.mulf %7, %7 : vector<8x32xf32>
    %cst_3 = arith.constant dense<0.000000e+00> : vector<8xf32>
    %9 = vector.multi_reduction <add>, %8, %cst_3 [1] : vector<8x32xf32> to vector<8xf32>
    %10 = vector.shape_cast %9 : vector<8xf32> to vector<8x1xf32>
    %cst_4 = arith.constant 3.200000e+01 : f32
    %11 = vector.broadcast %cst_4 : f32 to vector<8x1xf32>
    %12 = arith.divf %10, %11 : vector<8x1xf32>
    %13 = vector.broadcast %5 : vector<8x1xf32> to vector<8x32xf32>
    %14 = arith.subf %1, %13 : vector<8x32xf32>
    %cst_5 = arith.constant 9.99999974E-6 : f32
    %15 = vector.broadcast %cst_5 : f32 to vector<8x1xf32>
    %16 = arith.addf %12, %15 : vector<8x1xf32>
    %17 = math.rsqrt %16 : vector<8x1xf32>
    %18 = vector.broadcast %17 : vector<8x1xf32> to vector<8x32xf32>
    %19 = arith.mulf %14, %18 : vector<8x32xf32>
    %20 = arith.truncf %19 : vector<8x32xf32> to vector<8x32xbf16>
    %21 = vector.shape_cast %20 : vector<8x32xbf16> to vector<1x8x32xbf16>
    %22 = vector.broadcast %21 : vector<1x8x32xbf16> to vector<12x8x32xbf16>
    %c0_6 = arith.constant 0 : index
    %c0_7 = arith.constant 0 : index
    %c0_8 = arith.constant 0 : index
    %23 = vector.load %arg2[%c0_6, %c0_7, %c0_8] : memref<12x32x8xbf16, #tpu.memory_space<vmem>>, vector<12x32x8xbf16>
    "tpu.trace_start"() <{level = 10 : i32, message = "hsd,hde->hse"}> : () -> ()
    %cst_9 = arith.constant dense<0.000000e+00> : vector<12x8x8xf32>
    %24 = tpu.matmul %22, %23, %cst_9 {dimension_numbers = #tpu.dot_dimension_numbers<[2], [1], [1], [2], [0, 0, 0, 1, 1, 2], [0], [0]>} : vector<12x8x32xbf16>, vector<12x32x8xbf16>, vector<12x8x8xf32> -> vector<12x8x8xf32>
    "tpu.trace_stop"() : () -> ()
    %c0_10 = arith.constant 0 : index
    %c0_11 = arith.constant 0 : index
    %c0_12 = arith.constant 0 : index
    %25 = vector.load %arg3[%c0_10, %c0_11, %c0_12] : memref<12x1x8xf32, #tpu.memory_space<vmem>>, vector<12x1x8xf32>
    %26 = vector.broadcast %25 : vector<12x1x8xf32> to vector<12x8x8xf32>
    %27 = arith.addf %24, %26 : vector<12x8x8xf32>
    %28 = vector.extract_strided_slice %27 {offsets = [0, 0, 0], sizes = [4, 8, 8], strides = [1, 1, 1]} : vector<12x8x8xf32> to vector<4x8x8xf32>
    %29 = arith.truncf %28 : vector<4x8x8xf32> to vector<4x8x8xbf16>
    %30 = vector.extract_strided_slice %27 {offsets = [4, 0, 0], sizes = [4, 8, 8], strides = [1, 1, 1]} : vector<12x8x8xf32> to vector<4x8x8xf32>
    %31 = arith.truncf %30 : vector<4x8x8xf32> to vector<4x8x8xbf16>
    %32 = vector.extract_strided_slice %27 {offsets = [8, 0, 0], sizes = [4, 8, 8], strides = [1, 1, 1]} : vector<12x8x8xf32> to vector<4x8x8xf32>
    %33 = arith.truncf %32 : vector<4x8x8xf32> to vector<4x8x8xbf16>
    "tpu.trace_start"() <{level = 10 : i32, message = "hqd,hkd->hqk"}> : () -> ()
    %cst_13 = arith.constant dense<0.000000e+00> : vector<4x8x8xf32>
    %34 = tpu.matmul %29, %31, %cst_13 {dimension_numbers = #tpu.dot_dimension_numbers<[2], [2], [1], [1], [0, 0, 0, 1, 1, 1], [0], [0]>} : vector<4x8x8xbf16>, vector<4x8x8xbf16>, vector<4x8x8xf32> -> vector<4x8x8xf32>
    "tpu.trace_stop"() : () -> ()
    %cst_14 = arith.constant dense<0xFF800000> : vector<4x8xf32>
    %35 = vector.multi_reduction <maximumf>, %34, %cst_14 [2] : vector<4x8x8xf32> to vector<4x8xf32>
    %36 = vector.shape_cast %35 : vector<4x8xf32> to vector<4x8x1xf32>
    %37 = vector.broadcast %36 : vector<4x8x1xf32> to vector<4x8x8xf32>
    %38 = arith.subf %34, %37 : vector<4x8x8xf32>
    %39 = math.exp %38 : vector<4x8x8xf32>
    %cst_15 = arith.constant dense<0.000000e+00> : vector<4x8xf32>
    %40 = vector.multi_reduction <add>, %39, %cst_15 [2] : vector<4x8x8xf32> to vector<4x8xf32>
    %41 = vector.shape_cast %40 : vector<4x8xf32> to vector<4x8x1xf32>
    %42 = tpu.reciprocal %41 {approx = true} : vector<4x8x1xf32> -> vector<4x8x1xf32>
    %43 = vector.broadcast %42 : vector<4x8x1xf32> to vector<4x8x8xf32>
    %44 = arith.mulf %39, %43 : vector<4x8x8xf32>
    %45 = arith.truncf %44 : vector<4x8x8xf32> to vector<4x8x8xbf16>
    "tpu.trace_start"() <{level = 10 : i32, message = "hqk,hkd->hqd"}> : () -> ()
    %cst_16 = arith.constant dense<0.000000e+00> : vector<4x8x8xf32>
    %46 = tpu.matmul %45, %33, %cst_16 {dimension_numbers = #tpu.dot_dimension_numbers<[2], [1], [1], [2], [0, 0, 0, 1, 1, 2], [0], [0]>} : vector<4x8x8xbf16>, vector<4x8x8xbf16>, vector<4x8x8xf32> -> vector<4x8x8xf32>
    "tpu.trace_stop"() : () -> ()
    %47 = arith.truncf %46 : vector<4x8x8xf32> to vector<4x8x8xbf16>
    %c0_17 = arith.constant 0 : index
    %c0_18 = arith.constant 0 : index
    %c0_19 = arith.constant 0 : index
    %48 = vector.load %arg4[%c0_17, %c0_18, %c0_19] : memref<4x8x32xbf16, #tpu.memory_space<vmem>>, vector<4x8x32xbf16>
    "tpu.trace_start"() <{level = 10 : i32, message = "hsd,hde->hse"}> : () -> ()
    %cst_20 = arith.constant dense<0.000000e+00> : vector<4x8x32xf32>
    %49 = tpu.matmul %47, %48, %cst_20 {dimension_numbers = #tpu.dot_dimension_numbers<[2], [1], [1], [2], [0, 0, 0, 1, 1, 2], [0], [0]>} : vector<4x8x8xbf16>, vector<4x8x32xbf16>, vector<4x8x32xf32> -> vector<4x8x32xf32>
    "tpu.trace_stop"() : () -> ()
    %cst_21 = arith.constant dense<0.000000e+00> : vector<8x32xf32>
    %50 = vector.multi_reduction <add>, %49, %cst_21 [0] : vector<4x8x32xf32> to vector<8x32xf32>
    %c0_22 = arith.constant 0 : index
    %c0_23 = arith.constant 0 : index
    %51 = vector.load %arg5[%c0_22, %c0_23] : memref<1x32xf32, #tpu.memory_space<vmem>>, vector<1x32xf32>
    %52 = vector.broadcast %51 : vector<1x32xf32> to vector<8x32xf32>
    %53 = arith.addf %50, %52 : vector<8x32xf32>
    %54 = arith.addf %1, %53 : vector<8x32xf32>
    %cst_24 = arith.constant dense<0.000000e+00> : vector<8xf32>
    %55 = vector.multi_reduction <add>, %54, %cst_24 [1] : vector<8x32xf32> to vector<8xf32>
    %56 = vector.shape_cast %55 : vector<8xf32> to vector<8x1xf32>
    %cst_25 = arith.constant 3.200000e+01 : f32
    %57 = vector.broadcast %cst_25 : f32 to vector<8x1xf32>
    %58 = arith.divf %56, %57 : vector<8x1xf32>
    %59 = vector.broadcast %58 : vector<8x1xf32> to vector<8x32xf32>
    %60 = arith.subf %54, %59 : vector<8x32xf32>
    %61 = arith.mulf %60, %60 : vector<8x32xf32>
    %cst_26 = arith.constant dense<0.000000e+00> : vector<8xf32>
    %62 = vector.multi_reduction <add>, %61, %cst_26 [1] : vector<8x32xf32> to vector<8xf32>
    %63 = vector.shape_cast %62 : vector<8xf32> to vector<8x1xf32>
    %cst_27 = arith.constant 3.200000e+01 : f32
    %64 = vector.broadcast %cst_27 : f32 to vector<8x1xf32>
    %65 = arith.divf %63, %64 : vector<8x1xf32>
    %66 = vector.broadcast %58 : vector<8x1xf32> to vector<8x32xf32>
    %67 = arith.subf %54, %66 : vector<8x32xf32>
    %cst_28 = arith.constant 9.99999974E-6 : f32
    %68 = vector.broadcast %cst_28 : f32 to vector<8x1xf32>
    %69 = arith.addf %65, %68 : vector<8x1xf32>
    %70 = math.rsqrt %69 : vector<8x1xf32>
    %71 = vector.broadcast %70 : vector<8x1xf32> to vector<8x32xf32>
    %72 = arith.mulf %67, %71 : vector<8x32xf32>
    %73 = arith.truncf %72 : vector<8x32xf32> to vector<8x32xbf16>
    %c0_29 = arith.constant 0 : index
    %c0_30 = arith.constant 0 : index
    %74 = vector.load %arg6[%c0_29, %c0_30] : memref<32x64xbf16, #tpu.memory_space<vmem>>, vector<32x64xbf16>
    %cst_31 = arith.constant dense<0.000000e+00> : vector<8x64xf32>
    %75 = tpu.matmul %73, %74, %cst_31 {dimension_numbers = #tpu.dot_dimension_numbers<[1], [0], [0], [1], [0, 0, 1, 1], [], []>} : vector<8x32xbf16>, vector<32x64xbf16>, vector<8x64xf32> -> vector<8x64xf32>
    %c0_32 = arith.constant 0 : index
    %c0_33 = arith.constant 0 : index
    %76 = vector.load %arg7[%c0_32, %c0_33] : memref<1x64xf32, #tpu.memory_space<vmem>>, vector<1x64xf32>
    %77 = vector.broadcast %76 : vector<1x64xf32> to vector<8x64xf32>
    %78 = arith.addf %75, %77 : vector<8x64xf32>
    %cst_34 = arith.constant 5.000000e-01 : f32
    %79 = vector.broadcast %cst_34 : f32 to vector<8x64xf32>
    %80 = arith.mulf %79, %78 : vector<8x64xf32>
    %cst_35 = arith.constant 0.707106769 : f32
    %81 = vector.broadcast %cst_35 : f32 to vector<8x64xf32>
    %82 = arith.mulf %78, %81 : vector<8x64xf32>
    %83 = math.erf %82 : vector<8x64xf32>
    %cst_36 = arith.constant 1.000000e+00 : f32
    %84 = vector.broadcast %cst_36 : f32 to vector<8x64xf32>
    %85 = arith.addf %84, %83 : vector<8x64xf32>
    %86 = arith.mulf %80, %85 : vector<8x64xf32>
    %87 = arith.truncf %86 : vector<8x64xf32> to vector<8x64xbf16>
    %c0_37 = arith.constant 0 : index
    %c0_38 = arith.constant 0 : index
    %88 = vector.load %arg8[%c0_37, %c0_38] : memref<64x32xbf16, #tpu.memory_space<vmem>>, vector<64x32xbf16>
    %cst_39 = arith.constant dense<0.000000e+00> : vector<8x32xf32>
    %89 = tpu.matmul %87, %88, %cst_39 {dimension_numbers = #tpu.dot_dimension_numbers<[1], [0], [0], [1], [0, 0, 1, 1], [], []>} : vector<8x64xbf16>, vector<64x32xbf16>, vector<8x32xf32> -> vector<8x32xf32>
    %c0_40 = arith.constant 0 : index
    %c0_41 = arith.constant 0 : index
    %90 = vector.load %arg9[%c0_40, %c0_41] : memref<1x32xf32, #tpu.memory_space<vmem>>, vector<1x32xf32>
    %91 = vector.broadcast %90 : vector<1x32xf32> to vector<8x32xf32>
    %92 = arith.addf %89, %91 : vector<8x32xf32>
    %93 = arith.addf %54, %92 : vector<8x32xf32>
    %c0_42 = arith.constant 0 : index
    %c0_43 = arith.constant 0 : index
    %c0_44 = arith.constant 0 : index
    %94 = vector.load %arg10[%c0_42, %c0_43, %c0_44] : memref<1x8x32xf32, #tpu.memory_space<vmem>>, vector<1x8x32xf32>
    %95 = vector.shape_cast %94 : vector<1x8x32xf32> to vector<8x32xf32>
    %96 = vector.shape_cast %93 : vector<8x32xf32> to vector<1x8x32xf32>
    tpu.vector_store %arg10[%c0_42, %c0_43, %c0_44], %96 {strides = array<i32>} : memref<1x8x32xf32, #tpu.memory_space<vmem>>, vector<1x8x32xf32>,
    return
  }
  func.func @transform_0(%arg0: i32) -> (i32, i32, i32) {
    %c0_i32 = arith.constant 0 : i32
    %c0_i32_0 = arith.constant 0 : i32
    %c0_i32_1 = arith.constant 0 : i32
    return %arg0, %c0_i32, %c0_i32_0 : i32, i32, i32
  }
  func.func @transform_1(%arg0: i32) -> (i32, i32, i32) {
    %c0_i32 = arith.constant 0 : i32
    %c0_i32_0 = arith.constant 0 : i32
    %c0_i32_1 = arith.constant 0 : i32
    %c0_i32_2 = arith.constant 0 : i32
    return %c0_i32, %c0_i32_0, %c0_i32_1 : i32, i32, i32
  }
  func.func @transform_2(%arg0: i32) -> (i32, i32, i32) {
    %c0_i32 = arith.constant 0 : i32
    %c0_i32_0 = arith.constant 0 : i32
    %c0_i32_1 = arith.constant 0 : i32
    %c0_i32_2 = arith.constant 0 : i32
    return %c0_i32, %c0_i32_0, %c0_i32_1 : i32, i32, i32
  }
  func.func @transform_3(%arg0: i32) -> (i32, i32, i32) {
    %c0_i32 = arith.constant 0 : i32
    %c0_i32_0 = arith.constant 0 : i32
    %c0_i32_1 = arith.constant 0 : i32
    %c0_i32_2 = arith.constant 0 : i32
    return %c0_i32, %c0_i32_0, %c0_i32_1 : i32, i32, i32
  }
  func.func @transform_4(%arg0: i32) -> (i32, i32) {
    %c0_i32 = arith.constant 0 : i32
    %c0_i32_0 = arith.constant 0 : i32
    %c0_i32_1 = arith.constant 0 : i32
    return %c0_i32, %c0_i32_0 : i32, i32
  }
  func.func @transform_5(%arg0: i32) -> (i32, i32) {
    %c0_i32 = arith.constant 0 : i32
    %c0_i32_0 = arith.constant 0 : i32
    %c0_i32_1 = arith.constant 0 : i32
    return %c0_i32, %c0_i32_0 : i32, i32
  }
  func.func @transform_6(%arg0: i32) -> (i32, i32) {
    %c0_i32 = arith.constant 0 : i32
    %c0_i32_0 = arith.constant 0 : i32
    %c0_i32_1 = arith.constant 0 : i32
    return %c0_i32, %c0_i32_0 : i32, i32
  }
  func.func @transform_7(%arg0: i32) -> (i32, i32) {
    %c0_i32 = arith.constant 0 : i32
    %c0_i32_0 = arith.constant 0 : i32
    %c0_i32_1 = arith.constant 0 : i32
    return %c0_i32, %c0_i32_0 : i32, i32
  }
  func.func @transform_8(%arg0: i32) -> (i32, i32) {
    %c0_i32 = arith.constant 0 : i32
    %c0_i32_0 = arith.constant 0 : i32
    %c0_i32_1 = arith.constant 0 : i32
    return %c0_i32, %c0_i32_0 : i32, i32
  }
  func.func @transform_9(%arg0: i32) -> (i32, i32, i32) {
    %c0_i32 = arith.constant 0 : i32
    %c0_i32_0 = arith.constant 0 : i32
    %c0_i32_1 = arith.constant 0 : i32
    return %arg0, %c0_i32, %c0_i32_0 : i32, i32, i32
  }
}

</mosaic_0001>

<llo_original>
// kernel: mul.6
$region0: #{mul.6}
  #allocation0 [shape = 's32[1]{0}', space=sflag, size = 0x4, scoped, tag = 'scoped memory for mul.6']
  %s0 = inlined_call_operand.vmem [shape: f32[12,1,8], index: 0, kind: input, shape index: {}]
  %s1 = inlined_call_operand.vmem [shape: f32[12,1,8], index: 1, kind: input, shape index: {}]
  %s2 = inlined_call_operand.vmem [shape: f32[12,1,8], index: 2, kind: output, shape index: {}]
  %v3 = vld [vmem:[%s0] sm:$0x1]
  %v4 = vld [vmem:[%s1] sm:$0x1]
  %5 = xla_tuple %v3, %v4
  %6 = xla_tuple %5
  %v7 = vmul.f32 %v3, %v4
  %8 = xla_tuple %v7
  %9 = vst [vmem:[%s2] sm:$0x1] %v7
  %s10 = scalar_lea.vmem %s0, 1
  %v11 = vld [vmem:[%s10] sm:$0x1]
  %s12 = scalar_lea.vmem %s1, 1
  %v13 = vld [vmem:[%s12] sm:$0x1]
  %14 = xla_tuple %v11, %v13
  %15 = xla_tuple %14
  %v16 = vmul.f32 %v11, %v13
  %17 = xla_tuple %v16
  %s18 = scalar_lea.vmem %s2, 1
  %19 = vst [vmem:[%s18] sm:$0x1] %v16
  %s20 = scalar_lea.vmem %s0, 2
  %v21 = vld [vmem:[%s20] sm:$0x1]
  %s22 = scalar_lea.vmem %s1, 2
  %v23 = vld [vmem:[%s22] sm:$0x1]
  %24 = xla_tuple %v21, %v23
  %25 = xla_tuple %24
  %v26 = vmul.f32 %v21, %v23
  %27 = xla_tuple %v26
  %s28 = scalar_lea.vmem %s2, 2
  %29 = vst [vmem:[%s28] sm:$0x1] %v26
  %s30 = scalar_lea.vmem %s0, 3
  %v31 = vld [vmem:[%s30] sm:$0x1]
  %s32 = scalar_lea.vmem %s1, 3
  %v33 = vld [vmem:[%s32] sm:$0x1]
  %34 = xla_tuple %v31, %v33
  %35 = xla_tuple %34
  %v36 = vmul.f32 %v31, %v33
  %37 = xla_tuple %v36
  %s38 = scalar_lea.vmem %s2, 3
  %39 = vst [vmem:[%s38] sm:$0x1] %v36
  %s40 = scalar_lea.vmem %s0, 4
  %v41 = vld [vmem:[%s40] sm:$0x1]
  %s42 = scalar_lea.vmem %s1, 4
  %v43 = vld [vmem:[%s42] sm:$0x1]
  %44 = xla_tuple %v41, %v43
  %45 = xla_tuple %44
  %v46 = vmul.f32 %v41, %v43
  %47 = xla_tuple %v46
  %s48 = scalar_lea.vmem %s2, 4
  %49 = vst [vmem:[%s48] sm:$0x1] %v46
  %s50 = scalar_lea.vmem %s0, 5
  %v51 = vld [vmem:[%s50] sm:$0x1]
  %s52 = scalar_lea.vmem %s1, 5
  %v53 = vld [vmem:[%s52] sm:$0x1]
  %54 = xla_tuple %v51, %v53
  %55 = xla_tuple %54
  %v56 = vmul.f32 %v51, %v53
  %57 = xla_tuple %v56
  %s58 = scalar_lea.vmem %s2, 5
  %59 = vst [vmem:[%s58] sm:$0x1] %v56
  %s60 = scalar_lea.vmem %s0, 6
  %v61 = vld [vmem:[%s60] sm:$0x1]
  %s62 = scalar_lea.vmem %s1, 6
  %v63 = vld [vmem:[%s62] sm:$0x1]
  %64 = xla_tuple %v61, %v63
  %65 = xla_tuple %64
  %v66 = vmul.f32 %v61, %v63
  %67 = xla_tuple %v66
  %s68 = scalar_lea.vmem %s2, 6
  %69 = vst [vmem:[%s68] sm:$0x1] %v66
  %s70 = scalar_lea.vmem %s0, 7
  %v71 = vld [vmem:[%s70] sm:$0x1]
  %s72 = scalar_lea.vmem %s1, 7
  %v73 = vld [vmem:[%s72] sm:$0x1]
  %74 = xla_tuple %v71, %v73
  %75 = xla_tuple %74
  %v76 = vmul.f32 %v71, %v73
  %77 = xla_tuple %v76
  %s78 = scalar_lea.vmem %s2, 7
  %79 = vst [vmem:[%s78] sm:$0x1] %v76
  %s80 = scalar_lea.vmem %s0, 8
  %v81 = vld [vmem:[%s80] sm:$0x1]
  %s82 = scalar_lea.vmem %s1, 8
  %v83 = vld [vmem:[%s82] sm:$0x1]
  %84 = xla_tuple %v81, %v83
  %85 = xla_tuple %84
  %v86 = vmul.f32 %v81, %v83
  %87 = xla_tuple %v86
  %s88 = scalar_lea.vmem %s2, 8
  %89 = vst [vmem:[%s88] sm:$0x1] %v86
  %s90 = scalar_lea.vmem %s0, 9
  %v91 = vld [vmem:[%s90] sm:$0x1]
  %s92 = scalar_lea.vmem %s1, 9
  %v93 = vld [vmem:[%s92] sm:$0x1]
  %94 = xla_tuple %v91, %v93
  %95 = xla_tuple %94
  %v96 = vmul.f32 %v91, %v93
  %97 = xla_tuple %v96
  %s98 = scalar_lea.vmem %s2, 9
  %99 = vst [vmem:[%s98] sm:$0x1] %v96
  %s100 = scalar_lea.vmem %s0, 10
  %v101 = vld [vmem:[%s100] sm:$0x1]
  %s102 = scalar_lea.vmem %s1, 10
  %v103 = vld [vmem:[%s102] sm:$0x1]
  %104 = xla_tuple %v101, %v103
  %105 = xla_tuple %104
  %v106 = vmul.f32 %v101, %v103
  %107 = xla_tuple %v106
  %s108 = scalar_lea.vmem %s2, 10
  %109 = vst [vmem:[%s108] sm:$0x1] %v106
  %s110 = scalar_lea.vmem %s0, 11
  %v111 = vld [vmem:[%s110] sm:$0x1]
  %s112 = scalar_lea.vmem %s1, 11
  %v113 = vld [vmem:[%s112] sm:$0x1]
  %114 = xla_tuple %v111, %v113
  %115 = xla_tuple %114
  %v116 = vmul.f32 %v111, %v113
  %117 = xla_tuple %v116
  %s118 = scalar_lea.vmem %s2, 11
  %119 = vst [vmem:[%s118] sm:$0x1] %v116

// kernel: transformer_encoder_block.1
$region0: #{transformer_encoder_block.1}
  #allocation0 [shape = 'u32[]', space=smem, size = 0x4, offset = 0x4, fixed_abs, tag = 'smem constant byte address 0x4 - core index']
  #allocation1 [shape = 'u32[144,128]{1,0:T(1,128)}', space=vmem, size = 0x12000, scoped, tag = 'internal scratch']
  %s0 = inlined_call_operand.vmem [shape: f32[2,8,32], index: 0, kind: input, shape index: {}]
  %s1 = inlined_call_operand.vmem [shape: bf16[12,32,8], index: 1, kind: input, shape index: {}]
  %s2 = inlined_call_operand.vmem [shape: f32[12,1,8], index: 2, kind: input, shape index: {}]
  %s3 = inlined_call_operand.vmem [shape: bf16[4,8,32], index: 3, kind: input, shape index: {}]
  %s4 = inlined_call_operand.vmem [shape: f32[1,32], index: 4, kind: input, shape index: {}]
  %s5 = inlined_call_operand.vmem [shape: bf16[32,64], index: 5, kind: input, shape index: {}]
  %s6 = inlined_call_operand.vmem [shape: f32[1,64], index: 6, kind: input, shape index: {}]
  %s7 = inlined_call_operand.vmem [shape: bf16[64,32], index: 7, kind: input, shape index: {}]
  %s8 = inlined_call_operand.vmem [shape: f32[1,32], index: 8, kind: input, shape index: {}]
  %s9 = inlined_call_operand.hbm [shape: f32[2,8,32], index: 9, kind: output, shape index: {}]
  %s10 = sld [smem:[#allocation0]]
  $region69: #{transformer_encoder_block.1} parent=0
    _
  %s12 = ssub.s32 1, %s10
  %s13 = scalar_select 0, %s12, %s10
  $region1: #{transformer_encoder_block.1} parent=0
    #allocation2 [shape = 'u8[8192]{0}', space=vmem, size = 0x2000, scoped, tag = 'output window, operand 0']
    #allocation3 [shape = 's32[2]{0}', space=sflag, size = 0x8, scoped, tag = 'scoped memory for transformer_encoder_block.1']
    %14 = vsyncpa [#allocation3], 0
    %s15 = scalar_lea.sflag [#allocation3], 1
    %16 = vsyncpa %s15, 0
    loop: start=0, step=1, limit=4
    $region2: #{transformer_encoder_block.1} parent=1 // loop_pre_header
      _
    $region3: #{transformer_encoder_block.1} parent=1 // loop_header
      %s18 = sphi 0, %s22
      %p19 = scmp.ge.s32.totalorder %s18, 4
      %s28 = sphi 0, %s30
      %s31 = sphi 0, %s28
      %s32 = sphi 0, %s31
      %s48 = sphi 0, %s32
      %s52 = sphi 0, %s52
      %s54 = sphi 0, %s52
      %s55 = sphi 0, %s54
      %s69 = sphi 0, %s55
      %s73 = sphi 0, %s73
      %s75 = sphi 0, %s73
      %s76 = sphi 0, %s75
      %s90 = sphi 0, %s76
      %s94 = sphi 0, %s94
      %s96 = sphi 0, %s94
      %s97 = sphi 0, %s96
      %s111 = sphi 0, %s97
      %s115 = sphi 0, %s115
      %s117 = sphi 0, %s115
      %s118 = sphi 0, %s117
      %s132 = sphi 0, %s118
      %s136 = sphi 0, %s136
      %s138 = sphi 0, %s136
      %s139 = sphi 0, %s138
      %s153 = sphi 0, %s139
      %s157 = sphi 0, %s157
      %s159 = sphi 0, %s157
      %s160 = sphi 0, %s159
      %s174 = sphi 0, %s160
      %s178 = sphi 0, %s178
      %s180 = sphi 0, %s178
      %s181 = sphi 0, %s180
      %s195 = sphi 0, %s181
      %s199 = sphi 0, %s199
      %s201 = sphi 0, %s199
      %s202 = sphi 0, %s201
      %s216 = sphi 0, %s202
      %s222 = sphi 0, %s224
      %s225 = sphi 0, %s222
      %s226 = sphi 0, %s225
      %s242 = sphi 0, %s226
    $region4: #{transformer_encoder_block.1} parent=1 // loop_header_branch
      %21 = sbr.rel (%p19) target = $region8
    $region5: #{transformer_encoder_block.1} parent=1 // loop_body
      %s23 = ssub.s32 %s18, 1
      %s24 = ssub.s32 %s18, 2
      %s25 = sadd.s32 %s18, 1
      %s26 = ssub.s32 %s18, %s25
      %p27 = scmp.eq.s32.totalorder %s26, 0
      %s29 = sadd.s32 %s28, 1
      %s30 = scalar_select %p27, %s28, %s29
      %p33 = pneg %p27
      %p34 = scmp.eq.s32.totalorder %s18, 1
      %p35 = por %p33, %p34
      %p36 = scmp.ne.s32.totalorder %s28, %s31
      %p37 = scmp.eq.s32.totalorder %s18, 0
      %p38 = por %p36, %p37
      %p39 = scmp.ne.s32.totalorder %s28, %s31
      %p40 = scmp.eq.s32.totalorder %s23, 1
      %p41 = por %p39, %p40
      %p42 = scmp.ne.s32.totalorder %s31, %s32
      %p43 = scmp.eq.s32.totalorder %s23, 0
      %p44 = por %p42, %p43
      %p45 = scmp.ne.s32.totalorder %s31, %s32
      %p46 = scmp.eq.s32.totalorder %s24, 1
      %p47 = por %p45, %p46
      %p49 = scmp.ne.s32.totalorder %s32, %s48
      %p50 = scmp.eq.s32.totalorder %s24, 0
      %p51 = por %p49, %p50
      %s53 = sadd.s32 %s52, 1
      %p56 = scmp.eq.s32.totalorder %s18, 1
      %p57 = scmp.ne.s32.totalorder %s52, %s54
      %p58 = scmp.eq.s32.totalorder %s18, 0
      %p59 = por %p57, %p58
      %p60 = scmp.ne.s32.totalorder %s52, %s54
      %p61 = scmp.eq.s32.totalorder %s23, 1
      %p62 = por %p60, %p61
      %p63 = scmp.ne.s32.totalorder %s54, %s55
      %p64 = scmp.eq.s32.totalorder %s23, 0
      %p65 = por %p63, %p64
      %p66 = scmp.ne.s32.totalorder %s54, %s55
      %p67 = scmp.eq.s32.totalorder %s24, 1
      %p68 = por %p66, %p67
      %p70 = scmp.ne.s32.totalorder %s55, %s69
      %p71 = scmp.eq.s32.totalorder %s24, 0
      %p72 = por %p70, %p71
      %s74 = sadd.s32 %s73, 1
      %p77 = scmp.eq.s32.totalorder %s18, 1
      %p78 = scmp.ne.s32.totalorder %s73, %s75
      %p79 = scmp.eq.s32.totalorder %s18, 0
      %p80 = por %p78, %p79
      %p81 = scmp.ne.s32.totalorder %s73, %s75
      %p82 = scmp.eq.s32.totalorder %s23, 1
      %p83 = por %p81, %p82
      %p84 = scmp.ne.s32.totalorder %s75, %s76
      %p85 = scmp.eq.s32.totalorder %s23, 0
      %p86 = por %p84, %p85
      %p87 = scmp.ne.s32.totalorder %s75, %s76
      %p88 = scmp.eq.s32.totalorder %s24, 1
      %p89 = por %p87, %p88
      %p91 = scmp.ne.s32.totalorder %s76, %s90
      %p92 = scmp.eq.s32.totalorder %s24, 0
      %p93 = por %p91, %p92
      %s95 = sadd.s32 %s94, 1
      %p98 = scmp.eq.s32.totalorder %s18, 1
      %p99 = scmp.ne.s32.totalorder %s94, %s96
      %p100 = scmp.eq.s32.totalorder %s18, 0
      %p101 = por %p99, %p100
      %p102 = scmp.ne.s32.totalorder %s94, %s96
      %p103 = scmp.eq.s32.totalorder %s23, 1
      %p104 = por %p102, %p103
      %p105 = scmp.ne.s32.totalorder %s96, %s97
      %p106 = scmp.eq.s32.totalorder %s23, 0
      %p107 = por %p105, %p106
      %p108 = scmp.ne.s32.totalorder %s96, %s97
      %p109 = scmp.eq.s32.totalorder %s24, 1
      %p110 = por %p108, %p109
      %p112 = scmp.ne.s32.totalorder %s97, %s111
      %p113 = scmp.eq.s32.totalorder %s24, 0
      %p114 = por %p112, %p113
      %s116 = sadd.s32 %s115, 1
      %p119 = scmp.eq.s32.totalorder %s18, 1
      %p120 = scmp.ne.s32.totalorder %s115, %s117
      %p121 = scmp.eq.s32.totalorder %s18, 0
      %p122 = por %p120, %p121
      %p123 = scmp.ne.s32.totalorder %s115, %s117
      %p124 = scmp.eq.s32.totalorder %s23, 1
      %p125 = por %p123, %p124
      %p126 = scmp.ne.s32.totalorder %s117, %s118
      %p127 = scmp.eq.s32.totalorder %s23, 0
      %p128 = por %p126, %p127
      %p129 = scmp.ne.s32.totalorder %s117, %s118
      %p130 = scmp.eq.s32.totalorder %s24, 1
      %p131 = por %p129, %p130
      %p133 = scmp.ne.s32.totalorder %s118, %s132
      %p134 = scmp.eq.s32.totalorder %s24, 0
      %p135 = por %p133, %p134
      %s137 = sadd.s32 %s136, 1
      %p140 = scmp.eq.s32.totalorder %s18, 1
      %p141 = scmp.ne.s32.totalorder %s136, %s138
      %p142 = scmp.eq.s32.totalorder %s18, 0
      %p143 = por %p141, %p142
      %p144 = scmp.ne.s32.totalorder %s136, %s138
      %p145 = scmp.eq.s32.totalorder %s23, 1
      %p146 = por %p144, %p145
      %p147 = scmp.ne.s32.totalorder %s138, %s139
      %p148 = scmp.eq.s32.totalorder %s23, 0
      %p149 = por %p147, %p148
      %p150 = scmp.ne.s32.totalorder %s138, %s139
      %p151 = scmp.eq.s32.totalorder %s24, 1
      %p152 = por %p150, %p151
      %p154 = scmp.ne.s32.totalorder %s139, %s153
      %p155 = scmp.eq.s32.totalorder %s24, 0
      %p156 = por %p154, %p155
      %s158 = sadd.s32 %s157, 1
      %p161 = scmp.eq.s32.totalorder %s18, 1
      %p162 = scmp.ne.s32.totalorder %s157, %s159
      %p163 = scmp.eq.s32.totalorder %s18, 0
      %p164 = por %p162, %p163
      %p165 = scmp.ne.s32.totalorder %s157, %s159
      %p166 = scmp.eq.s32.totalorder %s23, 1
      %p167 = por %p165, %p166
      %p168 = scmp.ne.s32.totalorder %s159, %s160
      %p169 = scmp.eq.s32.totalorder %s23, 0
      %p170 = por %p168, %p169
      %p171 = scmp.ne.s32.totalorder %s159, %s160
      %p172 = scmp.eq.s32.totalorder %s24, 1
      %p173 = por %p171, %p172
      %p175 = scmp.ne.s32.totalorder %s160, %s174
      %p176 = scmp.eq.s32.totalorder %s24, 0
      %p177 = por %p175, %p176
      %s179 = sadd.s32 %s178, 1
      %p182 = scmp.eq.s32.totalorder %s18, 1
      %p183 = scmp.ne.s32.totalorder %s178, %s180
      %p184 = scmp.eq.s32.totalorder %s18, 0
      %p185 = por %p183, %p184
      %p186 = scmp.ne.s32.totalorder %s178, %s180
      %p187 = scmp.eq.s32.totalorder %s23, 1
      %p188 = por %p186, %p187
      %p189 = scmp.ne.s32.totalorder %s180, %s181
      %p190 = scmp.eq.s32.totalorder %s23, 0
      %p191 = por %p189, %p190
      %p192 = scmp.ne.s32.totalorder %s180, %s181
      %p193 = scmp.eq.s32.totalorder %s24, 1
      %p194 = por %p192, %p193
      %p196 = scmp.ne.s32.totalorder %s181, %s195
      %p197 = scmp.eq.s32.totalorder %s24, 0
      %p198 = por %p196, %p197
      %s200 = sadd.s32 %s199, 1
      %p203 = scmp.eq.s32.totalorder %s18, 1
      %p204 = scmp.ne.s32.totalorder %s199, %s201
      %p205 = scmp.eq.s32.totalorder %s18, 0
      %p206 = por %p204, %p205
      %p207 = scmp.ne.s32.totalorder %s199, %s201
      %p208 = scmp.eq.s32.totalorder %s23, 1
      %p209 = por %p207, %p208
      %p210 = scmp.ne.s32.totalorder %s201, %s202
      %p211 = scmp.eq.s32.totalorder %s23, 0
      %p212 = por %p210, %p211
      %p213 = scmp.ne.s32.totalorder %s201, %s202
      %p214 = scmp.eq.s32.totalorder %s24, 1
      %p215 = por %p213, %p214
      %p217 = scmp.ne.s32.totalorder %s202, %s216
      %p218 = scmp.eq.s32.totalorder %s24, 0
      %p219 = por %p217, %p218
      %s220 = ssub.s32 %s18, %s25
      %p221 = scmp.eq.s32.totalorder %s220, 0
      %s223 = sadd.s32 %s222, 1
      %s224 = scalar_select %p221, %s222, %s223
      %p227 = pneg %p221
      %p228 = scmp.eq.s32.totalorder %s18, 1
      %p229 = por %p227, %p228
      %p230 = scmp.ne.s32.totalorder %s222, %s225
      %p231 = scmp.eq.s32.totalorder %s18, 0
      %p232 = por %p230, %p231
      %p233 = scmp.ne.s32.totalorder %s222, %s225
      %p234 = scmp.eq.s32.totalorder %s23, 1
      %p235 = por %p233, %p234
      %p236 = scmp.ne.s32.totalorder %s225, %s226
      %p237 = scmp.eq.s32.totalorder %s23, 0
      %p238 = por %p236, %p237
      %p239 = scmp.ne.s32.totalorder %s225, %s226
      %p240 = scmp.eq.s32.totalorder %s24, 1
      %p241 = por %p239, %p240
      %p243 = scmp.ne.s32.totalorder %s226, %s242
      %p244 = scmp.eq.s32.totalorder %s24, 0
      %p245 = por %p243, %p244
      %p246 = scmp.le.s32.totalorder 1, %s18
      %p247 = scmp.lt.s32.totalorder %s18, 3
      %p248 = pnand %p246, %p247
      %p249 = pneg %p248
      // Predicated region
      $region9: #{transformer_encoder_block.1} parent=5 // pred_check
        _
      $region10: #{transformer_encoder_block.1} parent=5 // pred_check_branch
        %251 = sbr.rel (%p248) target = $region12
      $region11: #{transformer_encoder_block.1} parent=5 // pred_region
        %s252 = ssub.s32 %s18, 1
        // Predicated region
        $region13: #{transformer_encoder_block.1} parent=11 // pred_check
          %p253 = pneg %p65
        $region14: #{transformer_encoder_block.1} parent=11 // pred_check_branch
          %255 = sbr.rel (%p253) target = $region16
        $region15: #{transformer_encoder_block.1} parent=11 // pred_region
          _
        $region16: #{transformer_encoder_block.1} parent=11 // pred_fallthru
          _
        // Predicated region
        $region17: #{transformer_encoder_block.1} parent=11 // pred_check
          %p256 = pneg %p86
        $region18: #{transformer_encoder_block.1} parent=11 // pred_check_branch
          %258 = sbr.rel (%p256) target = $region20
        $region19: #{transformer_encoder_block.1} parent=11 // pred_region
          _
        $region20: #{transformer_encoder_block.1} parent=11 // pred_fallthru
          _
        // Predicated region
        $region21: #{transformer_encoder_block.1} parent=11 // pred_check
          %p259 = pneg %p107
        $region22: #{transformer_encoder_block.1} parent=11 // pred_check_branch
          %261 = sbr.rel (%p259) target = $region24
        $region23: #{transformer_encoder_block.1} parent=11 // pred_region
          _
        $region24: #{transformer_encoder_block.1} parent=11 // pred_fallthru
          _
        // Predicated region
        $region25: #{transformer_encoder_block.1} parent=11 // pred_check
          %p262 = pneg %p128
        $region26: #{transformer_encoder_block.1} parent=11 // pred_check_branch
          %264 = sbr.rel (%p262) target = $region28
        $region27: #{transformer_encoder_block.1} parent=11 // pred_region
          _
        $region28: #{transformer_encoder_block.1} parent=11 // pred_fallthru
          _
        // Predicated region
        $region29: #{transformer_encoder_block.1} parent=11 // pred_check
          %p265 = pneg %p149
        $region30: #{transformer_encoder_block.1} parent=11 // pred_check_branch
          %267 = sbr.rel (%p265) target = $region32
        $region31: #{transformer_encoder_block.1} parent=11 // pred_region
          _
        $region32: #{transformer_encoder_block.1} parent=11 // pred_fallthru
          _
        // Predicated region
        $region33: #{transformer_encoder_block.1} parent=11 // pred_check
          %p268 = pneg %p170
        $region34: #{transformer_encoder_block.1} parent=11 // pred_check_branch
          %270 = sbr.rel (%p268) target = $region36
        $region35: #{transformer_encoder_block.1} parent=11 // pred_region
          _
        $region36: #{transformer_encoder_block.1} parent=11 // pred_fallthru
          _
        // Predicated region
        $region37: #{transformer_encoder_block.1} parent=11 // pred_check
          %p271 = pneg %p191
        $region38: #{transformer_encoder_block.1} parent=11 // pred_check_branch
          %273 = sbr.rel (%p271) target = $region40
        $region39: #{transformer_encoder_block.1} parent=11 // pred_region
          _
        $region40: #{transformer_encoder_block.1} parent=11 // pred_fallthru
          _
        // Predicated region
        $region41: #{transformer_encoder_block.1} parent=11 // pred_check
          %p274 = pneg %p212
        $region42: #{transformer_encoder_block.1} parent=11 // pred_check_branch
          %276 = sbr.rel (%p274) target = $region44
        $region43: #{transformer_encoder_block.1} parent=11 // pred_region
          _
        $region44: #{transformer_encoder_block.1} parent=11 // pred_fallthru
          _
      $region12: #{transformer_encoder_block.1} parent=5 // pred_fallthru
        _
      %p277 = scmp.lt.s32.totalorder %s18, 2
      // Predicated region
      $region45: #{transformer_encoder_block.1} parent=5 // pred_check
        %p278 = pneg %p277
      $region46: #{transformer_encoder_block.1} parent=5 // pred_check_branch
        %280 = sbr.rel (%p278) target = $region48
      $region47: #{transformer_encoder_block.1} parent=5 // pred_region
        // Predicated region
        $region49: #{transformer_encoder_block.1} parent=47 // pred_check
          %p281 = pneg %p38
        $region50: #{transformer_encoder_block.1} parent=47 // pred_check_branch
          %283 = sbr.rel (%p281) target = $region52
        $region51: #{transformer_encoder_block.1} parent=47 // pred_region
          %p284 = scmp.lt.s32.totalorder %s18, 1
          %s285 = scalar_select %p284, %s18, 1
          %s286 = smul.addr %s285, 8
          %s287 = scalar_lea.vmem %s0, %s286
        $region52: #{transformer_encoder_block.1} parent=47 // pred_fallthru
          _
      $region48: #{transformer_encoder_block.1} parent=5 // pred_fallthru
        _
      %p288 = scmp.le.s32.totalorder 1, %s18
      %p289 = scmp.lt.s32.totalorder %s18, 3
      %p290 = pnand %p288, %p289
      %p291 = pneg %p290
      // Predicated region
      $region53: #{transformer_encoder_block.1} parent=5 // pred_check
        _
      $region54: #{transformer_encoder_block.1} parent=5 // pred_check_branch
        %293 = sbr.rel (%p290) target = $region56
      $region55: #{transformer_encoder_block.1} parent=5 // pred_region
        %s294 = ssub.s32 %s18, 1
        %p295 = scmp.lt.s32.totalorder %s23, 1
        %s296 = scalar_select %p295, %s23, 1
        %s297 = smul.addr %s296, 8
        %s298 = scalar_lea.vmem %s0, %s297
        %p299 = pneg %p44
        %p300 = pneg %p41
        %p301 = pneg %p65
        %p302 = pneg %p62
        %p303 = pneg %p86
        %p304 = pneg %p83
        %p305 = pneg %p107
        %p306 = pneg %p104
        %p307 = pneg %p128
        %p308 = pneg %p125
        %p309 = pneg %p149
        %p310 = pneg %p146
        %p311 = pneg %p170
        %p312 = pneg %p167
        %p313 = pneg %p191
        %p314 = pneg %p188
        %p315 = pneg %p212
        %p316 = pneg %p209
        %p317 = pneg %p238
        %p318 = pneg %p235
        %s319 = sand.u32 %s225, 1
        %s320 = scalar_lea.sflag [#allocation3], %s319
        %s321 = sand.u32 %s225, 1
        %s322 = smul.addr %s321, 8
        %s323 = scalar_lea.vmem [#allocation2], %s322
        %p324 = scmp.lt.s32.totalorder %s23, 1
        %s325 = scalar_select %p324, %s23, 1
        %s326 = smul.addr %s325, 8
        %s327 = scalar_lea.vmem %s0, %s326
        %v329 = vld [vmem:[%s327] sm:$0xff]
        %vm330 = vcmask 261120
        %v331 = vsel %vm330, %v329, 0.0
        %332 = vadd.xlane.f32.xlu0 %v331
        %v333 = vpop.xlane.xlu0 %332
        %v334 = vrcp.pop 32.0
        %v335 = vmul.f32 %v333, %v334
        %v336 = vsub.f32 %v329, %v335
        %v337 = vmul.f32 %v336, %v336
        %v338 = vsel %vm330, %v337, 0.0
        %339 = vadd.xlane.f32.xlu0 %v338
        %v340 = vpop.xlane.xlu0 %339
        %v341 = vmul.f32 %v340, %v334
        %v342 = vadd.f32 %v341, 1e-05
        %v343 = vrsqrt.pop %v342
        %v344 = vmul.f32 %v336, %v343
        %v345 = vpack.c.bf16 %v344, %v344
        %v346 = vld [vmem:[%s1] sm:$0xf]
        %v347 = vld [vmem:[%s1 + $0x4] sm:$0xf]
        %v348 = vld [vmem:[%s1 + $0x8] sm:$0xf]
        %v349 = vld [vmem:[%s1 + $0xc] sm:$0xf]
        %v350 = vld [vmem:[%s1 + $0x10] sm:$0xf]
        %v351 = vld [vmem:[%s1 + $0x14] sm:$0xf]
        %v352 = vld [vmem:[%s1 + $0x18] sm:$0xf]
        %v353 = vld [vmem:[%s1 + $0x1c] sm:$0xf]
        %v354 = vld [vmem:[%s1 + $0x20] sm:$0xf]
        %v355 = vld [vmem:[%s1 + $0x24] sm:$0xf]
        %v356 = vld [vmem:[%s1 + $0x28] sm:$0xf]
        %v357 = vld [vmem:[%s1 + $0x2c] sm:$0xf]
        %v358 = vld [vmem:[%s1 + $0x30] sm:$0xf]
        %v359 = vld [vmem:[%s1 + $0x34] sm:$0xf]
        %v360 = vld [vmem:[%s1 + $0x38] sm:$0xf]
        %v361 = vld [vmem:[%s1 + $0x3c] sm:$0xf]
        %v362 = vld [vmem:[%s1 + $0x40] sm:$0xf]
        %v363 = vld [vmem:[%s1 + $0x44] sm:$0xf]
        %v364 = vld [vmem:[%s1 + $0x48] sm:$0xf]
        %v365 = vld [vmem:[%s1 + $0x4c] sm:$0xf]
        %v366 = vld [vmem:[%s1 + $0x50] sm:$0xf]
        %v367 = vld [vmem:[%s1 + $0x54] sm:$0xf]
        %v368 = vld [vmem:[%s1 + $0x58] sm:$0xf]
        %v369 = vld [vmem:[%s1 + $0x5c] sm:$0xf]
        %v370 = vld [vmem:[%s1 + $0x60] sm:$0xf]
        %v371 = vld [vmem:[%s1 + $0x64] sm:$0xf]
        %v372 = vld [vmem:[%s1 + $0x68] sm:$0xf]
        %v373 = vld [vmem:[%s1 + $0x6c] sm:$0xf]
        %v374 = vld [vmem:[%s1 + $0x70] sm:$0xf]
        %v375 = vld [vmem:[%s1 + $0x74] sm:$0xf]
        %v376 = vld [vmem:[%s1 + $0x78] sm:$0xf]
        %v377 = vld [vmem:[%s1 + $0x7c] sm:$0xf]
        %v378 = vld [vmem:[%s1 + $0x80] sm:$0xf]
        %v379 = vld [vmem:[%s1 + $0x84] sm:$0xf]
        %v380 = vld [vmem:[%s1 + $0x88] sm:$0xf]
        %v381 = vld [vmem:[%s1 + $0x8c] sm:$0xf]
        %v382 = vld [vmem:[%s1 + $0x90] sm:$0xf]
        %v383 = vld [vmem:[%s1 + $0x94] sm:$0xf]
        %v384 = vld [vmem:[%s1 + $0x98] sm:$0xf]
        %v385 = vld [vmem:[%s1 + $0x9c] sm:$0xf]
        %v386 = vld [vmem:[%s1 + $0xa0] sm:$0xf]
        %v387 = vld [vmem:[%s1 + $0xa4] sm:$0xf]
        %v388 = vld [vmem:[%s1 + $0xa8] sm:$0xf]
        %v389 = vld [vmem:[%s1 + $0xac] sm:$0xf]
        %v390 = vld [vmem:[%s1 + $0xb0] sm:$0xf]
        %v391 = vld [vmem:[%s1 + $0xb4] sm:$0xf]
        %v392 = vld [vmem:[%s1 + $0xb8] sm:$0xf]
        %v393 = vld [vmem:[%s1 + $0xbc] sm:$0xf]
        %v394 = vld [vmem:[%s2] sm:$0x1]
        %v395 = vld [vmem:[%s2 + $0x1] sm:$0x1]
        %v396 = vld [vmem:[%s2 + $0x2] sm:$0x1]
        %v397 = vld [vmem:[%s2 + $0x3] sm:$0x1]
        %v398 = vld [vmem:[%s2 + $0x4] sm:$0x1]
        %v399 = vld [vmem:[%s2 + $0x5] sm:$0x1]
        %v400 = vld [vmem:[%s2 + $0x6] sm:$0x1]
        %v401 = vld [vmem:[%s2 + $0x7] sm:$0x1]
        %v402 = vld [vmem:[%s2 + $0x8] sm:$0x1]
        %v403 = vld [vmem:[%s2 + $0x9] sm:$0x1]
        %v404 = vld [vmem:[%s2 + $0xa] sm:$0x1]
        %v405 = vld [vmem:[%s2 + $0xb] sm:$0x1]
        %v418 = vlaneseq
        %v419 = vshrl.u32 %v418, 7
        %v420 = vsub.s32 0, %v419
        %v421 = vrot.slane %v394, %v420
        %v422 = vlaneseq
        %v423 = vshrl.u32 %v422, 7
        %v424 = vsub.s32 0, %v423
        %v425 = vrot.slane %v395, %v424
        %v426 = vlaneseq
        %v427 = vshrl.u32 %v426, 7
        %v428 = vsub.s32 0, %v427
        %v429 = vrot.slane %v396, %v428
        %v430 = vlaneseq
        %v431 = vshrl.u32 %v430, 7
        %v432 = vsub.s32 0, %v431
        %v433 = vrot.slane %v397, %v432
        %v434 = vlaneseq
        %v435 = vshrl.u32 %v434, 7
        %v436 = vsub.s32 0, %v435
        %v437 = vrot.slane %v398, %v436
        %v438 = vlaneseq
        %v439 = vshrl.u32 %v438, 7
        %v440 = vsub.s32 0, %v439
        %v441 = vrot.slane %v399, %v440
        %v442 = vlaneseq
        %v443 = vshrl.u32 %v442, 7
        %v444 = vsub.s32 0, %v443
        %v445 = vrot.slane %v400, %v444
        %v446 = vlaneseq
        %v447 = vshrl.u32 %v446, 7
        %v448 = vsub.s32 0, %v447
        %v449 = vrot.slane %v401, %v448
        %v450 = vlaneseq
        %v451 = vshrl.u32 %v450, 7
        %v452 = vsub.s32 0, %v451
        %v453 = vrot.slane %v402, %v452
        %v454 = vlaneseq
        %v455 = vshrl.u32 %v454, 7
        %v456 = vsub.s32 0, %v455
        %v457 = vrot.slane %v403, %v456
        %v458 = vlaneseq
        %v459 = vshrl.u32 %v458, 7
        %v460 = vsub.s32 0, %v459
        %v461 = vrot.slane %v404, %v460
        %v462 = vlaneseq
        %v463 = vshrl.u32 %v462, 7
        %v464 = vsub.s32 0, %v463
        %v465 = vrot.slane %v405, %v464
        %v482 = vunpack.c.l.b16 %v346
        %v483 = vunpack.c.l.b16 %v347
        %v484 = vunpack.c.l.b16 %v348
        %v485 = vunpack.c.l.b16 %v349
        %v486 = vpack.c.b16 %v483, %v482
        %v487 = vpack.c.b16 %v485, %v484
        %v491 = vsel %vm330, %v345, 0
        %493 = vmatprep.subr.bf16.mxu0 0
        %494 = vmatpush1.bf16.msra.mxu0 %v486
        %495 = vmatprep.subr.bf16.mxu0 0
        %496 = vmatpush1.bf16.msra.mxu0 %v487
        %497 = vmatprep.subr.bf16.mxu0 0
        %498 = vmatpush1.bf16.msra.mxu0 0
        %499 = vmatprep.subr.bf16.mxu0 0
        %500 = vmatpush1.bf16.msra.mxu0 0
        %501 = vmatprep.subr.bf16.mxu0 0
        %502 = vmatpush1.bf16.msra.mxu0 0
        %503 = vmatprep.subr.bf16.mxu0 0
        %504 = vmatpush1.bf16.msra.mxu0 0
        %505 = vmatprep.subr.bf16.mxu0 0
        %506 = vmatpush1.bf16.msra.mxu0 0
        %507 = vmatprep.subr.bf16.mxu0 0
        %508 = vmatpush1.bf16.msra.mxu0 0
        %509 = vmatprep.subr.bf16.mxu0 0
        %510 = vmatpush1.bf16.msra.mxu0 0
        %511 = vmatprep.subr.bf16.mxu0 0
        %512 = vmatpush1.bf16.msra.mxu0 0
        %513 = vmatprep.subr.bf16.mxu0 0
        %514 = vmatpush1.bf16.msra.mxu0 0
        %515 = vmatprep.subr.bf16.mxu0 0
        %516 = vmatpush1.bf16.msra.mxu0 0
        %517 = vmatprep.subr.bf16.mxu0 0
        %518 = vmatpush1.bf16.msra.mxu0 0
        %519 = vmatprep.subr.bf16.mxu0 0
        %520 = vmatpush1.bf16.msra.mxu0 0
        %521 = vmatprep.subr.bf16.mxu0 0
        %522 = vmatpush1.bf16.msra.mxu0 0
        %523 = vmatprep.subr.bf16.mxu0 0
        %524 = vmatpush1.bf16.msra.mxu0 0
        %525 = vmatprep.mubr.bf16.mxu0 0
        %526 = vmatmul.mubr.bf16.gmra.mrb[0].mxu0 %v491
        %v527 = vpop.f32.mrb[0].mxu0
        %v528 = vadd.f32 %v421, %v527
        %v529 = vpop.f32.mrb[0].mxu0
        %v530 = vpop.f32.mrb[0].mxu0
        %v531 = vpop.f32.mrb[0].mxu0
        %532 = vdwg.mxu0
        %v537 = vunpack.c.l.b16 %v350
        %v538 = vunpack.c.l.b16 %v351
        %v539 = vunpack.c.l.b16 %v352
        %v540 = vunpack.c.l.b16 %v353
        %v541 = vpack.c.b16 %v538, %v537
        %v542 = vpack.c.b16 %v540, %v539
        %545 = vmatprep.subr.bf16.mxu0 0
        %546 = vmatpush1.bf16.msra.mxu0 %v541
        %547 = vmatprep.subr.bf16.mxu0 0
        %548 = vmatpush1.bf16.msra.mxu0 %v542
        %549 = vmatprep.subr.bf16.mxu0 0
        %550 = vmatpush1.bf16.msra.mxu0 0
        %551 = vmatprep.subr.bf16.mxu0 0
        %552 = vmatpush1.bf16.msra.mxu0 0
        %553 = vmatprep.subr.bf16.mxu0 0
        %554 = vmatpush1.bf16.msra.mxu0 0
        %555 = vmatprep.subr.bf16.mxu0 0
        %556 = vmatpush1.bf16.msra.mxu0 0
        %557 = vmatprep.subr.bf16.mxu0 0
        %558 = vmatpush1.bf16.msra.mxu0 0
        %559 = vmatprep.subr.bf16.mxu0 0
        %560 = vmatpush1.bf16.msra.mxu0 0
        %561 = vmatprep.subr.bf16.mxu0 0
        %562 = vmatpush1.bf16.msra.mxu0 0
        %563 = vmatprep.subr.bf16.mxu0 0
        %564 = vmatpush1.bf16.msra.mxu0 0
        %565 = vmatprep.subr.bf16.mxu0 0
        %566 = vmatpush1.bf16.msra.mxu0 0
        %567 = vmatprep.subr.bf16.mxu0 0
        %568 = vmatpush1.bf16.msra.mxu0 0
        %569 = vmatprep.subr.bf16.mxu0 0
        %570 = vmatpush1.bf16.msra.mxu0 0
        %571 = vmatprep.subr.bf16.mxu0 0
        %572 = vmatpush1.bf16.msra.mxu0 0
        %573 = vmatprep.subr.bf16.mxu0 0
        %574 = vmatpush1.bf16.msra.mxu0 0
        %575 = vmatprep.subr.bf16.mxu0 0
        %576 = vmatpush1.bf16.msra.mxu0 0
        %577 = vmatprep.mubr.bf16.mxu0 0
        %578 = vmatmul.mubr.bf16.gmra.mrb[0].mxu0 %v491
        %v579 = vpop.f32.mrb[0].mxu0
        %v580 = vadd.f32 %v425, %v579
        %v581 = vpop.f32.mrb[0].mxu0
        %v582 = vpop.f32.mrb[0].mxu0
        %v583 = vpop.f32.mrb[0].mxu0
        %584 = vdwg.mxu0
        %v589 = vunpack.c.l.b16 %v354
        %v590 = vunpack.c.l.b16 %v355
        %v591 = vunpack.c.l.b16 %v356
        %v592 = vunpack.c.l.b16 %v357
        %v593 = vpack.c.b16 %v590, %v589
        %v594 = vpack.c.b16 %v592, %v591
        %597 = vmatprep.subr.bf16.mxu0 0
        %598 = vmatpush1.bf16.msra.mxu0 %v593
        %599 = vmatprep.subr.bf16.mxu0 0
        %600 = vmatpush1.bf16.msra.mxu0 %v594
        %601 = vmatprep.subr.bf16.mxu0 0
        %602 = vmatpush1.bf16.msra.mxu0 0
        %603 = vmatprep.subr.bf16.mxu0 0
        %604 = vmatpush1.bf16.msra.mxu0 0
        %605 = vmatprep.subr.bf16.mxu0 0
        %606 = vmatpush1.bf16.msra.mxu0 0
        %607 = vmatprep.subr.bf16.mxu0 0
        %608 = vmatpush1.bf16.msra.mxu0 0
        %609 = vmatprep.subr.bf16.mxu0 0
        %610 = vmatpush1.bf16.msra.mxu0 0
        %611 = vmatprep.subr.bf16.mxu0 0
        %612 = vmatpush1.bf16.msra.mxu0 0
        %613 = vmatprep.subr.bf16.mxu0 0
        %614 = vmatpush1.bf16.msra.mxu0 0
        %615 = vmatprep.subr.bf16.mxu0 0
        %616 = vmatpush1.bf16.msra.mxu0 0
        %617 = vmatprep.subr.bf16.mxu0 0
        %618 = vmatpush1.bf16.msra.mxu0 0
        %619 = vmatprep.subr.bf16.mxu0 0
        %620 = vmatpush1.bf16.msra.mxu0 0
        %621 = vmatprep.subr.bf16.mxu0 0
        %622 = vmatpush1.bf16.msra.mxu0 0
        %623 = vmatprep.subr.bf16.mxu0 0
        %624 = vmatpush1.bf16.msra.mxu0 0
        %625 = vmatprep.subr.bf16.mxu0 0
        %626 = vmatpush1.bf16.msra.mxu0 0
        %627 = vmatprep.subr.bf16.mxu0 0
        %628 = vmatpush1.bf16.msra.mxu0 0
        %629 = vmatprep.mubr.bf16.mxu0 0
        %630 = vmatmul.mubr.bf16.gmra.mrb[0].mxu0 %v491
        %v631 = vpop.f32.mrb[0].mxu0
        %v632 = vadd.f32 %v429, %v631
        %v633 = vpop.f32.mrb[0].mxu0
        %v634 = vpop.f32.mrb[0].mxu0
        %v635 = vpop.f32.mrb[0].mxu0
        %636 = vdwg.mxu0
        %v641 = vunpack.c.l.b16 %v358
        %v642 = vunpack.c.l.b16 %v359
        %v643 = vunpack.c.l.b16 %v360
        %v644 = vunpack.c.l.b16 %v361
        %v645 = vpack.c.b16 %v642, %v641
        %v646 = vpack.c.b16 %v644, %v643
        %649 = vmatprep.subr.bf16.mxu0 0
        %650 = vmatpush1.bf16.msra.mxu0 %v645
        %651 = vmatprep.subr.bf16.mxu0 0
        %652 = vmatpush1.bf16.msra.mxu0 %v646
        %653 = vmatprep.subr.bf16.mxu0 0
        %654 = vmatpush1.bf16.msra.mxu0 0
        %655 = vmatprep.subr.bf16.mxu0 0
        %656 = vmatpush1.bf16.msra.mxu0 0
        %657 = vmatprep.subr.bf16.mxu0 0
        %658 = vmatpush1.bf16.msra.mxu0 0
        %659 = vmatprep.subr.bf16.mxu0 0
        %660 = vmatpush1.bf16.msra.mxu0 0
        %661 = vmatprep.subr.bf16.mxu0 0
        %662 = vmatpush1.bf16.msra.mxu0 0
        %663 = vmatprep.subr.bf16.mxu0 0
        %664 = vmatpush1.bf16.msra.mxu0 0
        %665 = vmatprep.subr.bf16.mxu0 0
        %666 = vmatpush1.bf16.msra.mxu0 0
        %667 = vmatprep.subr.bf16.mxu0 0
        %668 = vmatpush1.bf16.msra.mxu0 0
        %669 = vmatprep.subr.bf16.mxu0 0
        %670 = vmatpush1.bf16.msra.mxu0 0
        %671 = vmatprep.subr.bf16.mxu0 0
        %672 = vmatpush1.bf16.msra.mxu0 0
        %673 = vmatprep.subr.bf16.mxu0 0
        %674 = vmatpush1.bf16.msra.mxu0 0
        %675 = vmatprep.subr.bf16.mxu0 0
        %676 = vmatpush1.bf16.msra.mxu0 0
        %677 = vmatprep.subr.bf16.mxu0 0
        %678 = vmatpush1.bf16.msra.mxu0 0
        %679 = vmatprep.subr.bf16.mxu0 0
        %680 = vmatpush1.bf16.msra.mxu0 0
        %681 = vmatprep.mubr.bf16.mxu0 0
        %682 = vmatmul.mubr.bf16.gmra.mrb[0].mxu0 %v491
        %v683 = vpop.f32.mrb[0].mxu0
        %v684 = vadd.f32 %v433, %v683
        %v685 = vpop.f32.mrb[0].mxu0
        %v686 = vpop.f32.mrb[0].mxu0
        %v687 = vpop.f32.mrb[0].mxu0
        %688 = vdwg.mxu0
        %v693 = vunpack.c.l.b16 %v362
        %v694 = vunpack.c.l.b16 %v363
        %v695 = vunpack.c.l.b16 %v364
        %v696 = vunpack.c.l.b16 %v365
        %v697 = vpack.c.b16 %v694, %v693
        %v698 = vpack.c.b16 %v696, %v695
        %701 = vmatprep.subr.bf16.mxu0 0
        %702 = vmatpush1.bf16.msra.mxu0 %v697
        %703 = vmatprep.subr.bf16.mxu0 0
        %704 = vmatpush1.bf16.msra.mxu0 %v698
        %705 = vmatprep.subr.bf16.mxu0 0
        %706 = vmatpush1.bf16.msra.mxu0 0
        %707 = vmatprep.subr.bf16.mxu0 0
        %708 = vmatpush1.bf16.msra.mxu0 0
        %709 = vmatprep.subr.bf16.mxu0 0
        %710 = vmatpush1.bf16.msra.mxu0 0
        %711 = vmatprep.subr.bf16.mxu0 0
        %712 = vmatpush1.bf16.msra.mxu0 0
        %713 = vmatprep.subr.bf16.mxu0 0
        %714 = vmatpush1.bf16.msra.mxu0 0
        %715 = vmatprep.subr.bf16.mxu0 0
        %716 = vmatpush1.bf16.msra.mxu0 0
        %717 = vmatprep.subr.bf16.mxu0 0
        %718 = vmatpush1.bf16.msra.mxu0 0
        %719 = vmatprep.subr.bf16.mxu0 0
        %720 = vmatpush1.bf16.msra.mxu0 0
        %721 = vmatprep.subr.bf16.mxu0 0
        %722 = vmatpush1.bf16.msra.mxu0 0
        %723 = vmatprep.subr.bf16.mxu0 0
        %724 = vmatpush1.bf16.msra.mxu0 0
        %725 = vmatprep.subr.bf16.mxu0 0
        %726 = vmatpush1.bf16.msra.mxu0 0
        %727 = vmatprep.subr.bf16.mxu0 0
        %728 = vmatpush1.bf16.msra.mxu0 0
        %729 = vmatprep.subr.bf16.mxu0 0
        %730 = vmatpush1.bf16.msra.mxu0 0
        %731 = vmatprep.subr.bf16.mxu0 0
        %732 = vmatpush1.bf16.msra.mxu0 0
        %733 = vmatprep.mubr.bf16.mxu0 0
        %734 = vmatmul.mubr.bf16.gmra.mrb[0].mxu0 %v491
        %v735 = vpop.f32.mrb[0].mxu0
        %v736 = vadd.f32 %v437, %v735
        %v737 = vpop.f32.mrb[0].mxu0
        %v738 = vpop.f32.mrb[0].mxu0
        %v739 = vpop.f32.mrb[0].mxu0
        %740 = vdwg.mxu0
        %v745 = vunpack.c.l.b16 %v366
        %v746 = vunpack.c.l.b16 %v367
        %v747 = vunpack.c.l.b16 %v368
        %v748 = vunpack.c.l.b16 %v369
        %v749 = vpack.c.b16 %v746, %v745
        %v750 = vpack.c.b16 %v748, %v747
        %753 = vmatprep.subr.bf16.mxu0 0
        %754 = vmatpush1.bf16.msra.mxu0 %v749
        %755 = vmatprep.subr.bf16.mxu0 0
        %756 = vmatpush1.bf16.msra.mxu0 %v750
        %757 = vmatprep.subr.bf16.mxu0 0
        %758 = vmatpush1.bf16.msra.mxu0 0
        %759 = vmatprep.subr.bf16.mxu0 0
        %760 = vmatpush1.bf16.msra.mxu0 0
        %761 = vmatprep.subr.bf16.mxu0 0
        %762 = vmatpush1.bf16.msra.mxu0 0
        %763 = vmatprep.subr.bf16.mxu0 0
        %764 = vmatpush1.bf16.msra.mxu0 0
        %765 = vmatprep.subr.bf16.mxu0 0
        %766 = vmatpush1.bf16.msra.mxu0 0
        %767 = vmatprep.subr.bf16.mxu0 0
        %768 = vmatpush1.bf16.msra.mxu0 0
        %769 = vmatprep.subr.bf16.mxu0 0
        %770 = vmatpush1.bf16.msra.mxu0 0
        %771 = vmatprep.subr.bf16.mxu0 0
        %772 = vmatpush1.bf16.msra.mxu0 0
        %773 = vmatprep.subr.bf16.mxu0 0
        %774 = vmatpush1.bf16.msra.mxu0 0
        %775 = vmatprep.subr.bf16.mxu0 0
        %776 = vmatpush1.bf16.msra.mxu0 0
        %777 = vmatprep.subr.bf16.mxu0 0
        %778 = vmatpush1.bf16.msra.mxu0 0
        %779 = vmatprep.subr.bf16.mxu0 0
        %780 = vmatpush1.bf16.msra.mxu0 0
        %781 = vmatprep.subr.bf16.mxu0 0
        %782 = vmatpush1.bf16.msra.mxu0 0
        %783 = vmatprep.subr.bf16.mxu0 0
        %784 = vmatpush1.bf16.msra.mxu0 0
        %785 = vmatprep.mubr.bf16.mxu0 0
        %786 = vmatmul.mubr.bf16.gmra.mrb[0].mxu0 %v491
        %v787 = vpop.f32.mrb[0].mxu0
        %v788 = vadd.f32 %v441, %v787
        %v789 = vpop.f32.mrb[0].mxu0
        %v790 = vpop.f32.mrb[0].mxu0
        %v791 = vpop.f32.mrb[0].mxu0
        %792 = vdwg.mxu0
        %v797 = vunpack.c.l.b16 %v370
        %v798 = vunpack.c.l.b16 %v371
        %v799 = vunpack.c.l.b16 %v372
        %v800 = vunpack.c.l.b16 %v373
        %v801 = vpack.c.b16 %v798, %v797
        %v802 = vpack.c.b16 %v800, %v799
        %805 = vmatprep.subr.bf16.mxu0 0
        %806 = vmatpush1.bf16.msra.mxu0 %v801
        %807 = vmatprep.subr.bf16.mxu0 0
        %808 = vmatpush1.bf16.msra.mxu0 %v802
        %809 = vmatprep.subr.bf16.mxu0 0
        %810 = vmatpush1.bf16.msra.mxu0 0
        %811 = vmatprep.subr.bf16.mxu0 0
        %812 = vmatpush1.bf16.msra.mxu0 0
        %813 = vmatprep.subr.bf16.mxu0 0
        %814 = vmatpush1.bf16.msra.mxu0 0
        %815 = vmatprep.subr.bf16.mxu0 0
        %816 = vmatpush1.bf16.msra.mxu0 0
        %817 = vmatprep.subr.bf16.mxu0 0
        %818 = vmatpush1.bf16.msra.mxu0 0
        %819 = vmatprep.subr.bf16.mxu0 0
        %820 = vmatpush1.bf16.msra.mxu0 0
        %821 = vmatprep.subr.bf16.mxu0 0
        %822 = vmatpush1.bf16.msra.mxu0 0
        %823 = vmatprep.subr.bf16.mxu0 0
        %824 = vmatpush1.bf16.msra.mxu0 0
        %825 = vmatprep.subr.bf16.mxu0 0
        %826 = vmatpush1.bf16.msra.mxu0 0
        %827 = vmatprep.subr.bf16.mxu0 0
        %828 = vmatpush1.bf16.msra.mxu0 0
        %829 = vmatprep.subr.bf16.mxu0 0
        %830 = vmatpush1.bf16.msra.mxu0 0
        %831 = vmatprep.subr.bf16.mxu0 0
        %832 = vmatpush1.bf16.msra.mxu0 0
        %833 = vmatprep.subr.bf16.mxu0 0
        %834 = vmatpush1.bf16.msra.mxu0 0
        %835 = vmatprep.subr.bf16.mxu0 0
        %836 = vmatpush1.bf16.msra.mxu0 0
        %837 = vmatprep.mubr.bf16.mxu0 0
        %838 = vmatmul.mubr.bf16.gmra.mrb[0].mxu0 %v491
        %v839 = vpop.f32.mrb[0].mxu0
        %v840 = vadd.f32 %v445, %v839
        %v841 = vpop.f32.mrb[0].mxu0
        %v842 = vpop.f32.mrb[0].mxu0
        %v843 = vpop.f32.mrb[0].mxu0
        %844 = vdwg.mxu0
        %v849 = vunpack.c.l.b16 %v374
        %v850 = vunpack.c.l.b16 %v375
        %v851 = vunpack.c.l.b16 %v376
        %v852 = vunpack.c.l.b16 %v377
        %v853 = vpack.c.b16 %v850, %v849
        %v854 = vpack.c.b16 %v852, %v851
        %857 = vmatprep.subr.bf16.mxu0 0
        %858 = vmatpush1.bf16.msra.mxu0 %v853
        %859 = vmatprep.subr.bf16.mxu0 0
        %860 = vmatpush1.bf16.msra.mxu0 %v854
        %861 = vmatprep.subr.bf16.mxu0 0
        %862 = vmatpush1.bf16.msra.mxu0 0
        %863 = vmatprep.subr.bf16.mxu0 0
        %864 = vmatpush1.bf16.msra.mxu0 0
        %865 = vmatprep.subr.bf16.mxu0 0
        %866 = vmatpush1.bf16.msra.mxu0 0
        %867 = vmatprep.subr.bf16.mxu0 0
        %868 = vmatpush1.bf16.msra.mxu0 0
        %869 = vmatprep.subr.bf16.mxu0 0
        %870 = vmatpush1.bf16.msra.mxu0 0
        %871 = vmatprep.subr.bf16.mxu0 0
        %872 = vmatpush1.bf16.msra.mxu0 0
        %873 = vmatprep.subr.bf16.mxu0 0
        %874 = vmatpush1.bf16.msra.mxu0 0
        %875 = vmatprep.subr.bf16.mxu0 0
        %876 = vmatpush1.bf16.msra.mxu0 0
        %877 = vmatprep.subr.bf16.mxu0 0
        %878 = vmatpush1.bf16.msra.mxu0 0
        %879 = vmatprep.subr.bf16.mxu0 0
        %880 = vmatpush1.bf16.msra.mxu0 0
        %881 = vmatprep.subr.bf16.mxu0 0
        %882 = vmatpush1.bf16.msra.mxu0 0
        %883 = vmatprep.subr.bf16.mxu0 0
        %884 = vmatpush1.bf16.msra.mxu0 0
        %885 = vmatprep.subr.bf16.mxu0 0
        %886 = vmatpush1.bf16.msra.mxu0 0
        %887 = vmatprep.subr.bf16.mxu0 0
        %888 = vmatpush1.bf16.msra.mxu0 0
        %889 = vmatprep.mubr.bf16.mxu0 0
        %890 = vmatmul.mubr.bf16.gmra.mrb[0].mxu0 %v491
        %v891 = vpop.f32.mrb[0].mxu0
        %v892 = vadd.f32 %v449, %v891
        %v893 = vpop.f32.mrb[0].mxu0
        %v894 = vpop.f32.mrb[0].mxu0
        %v895 = vpop.f32.mrb[0].mxu0
        %896 = vdwg.mxu0
        %v901 = vunpack.c.l.b16 %v378
        %v902 = vunpack.c.l.b16 %v379
        %v903 = vunpack.c.l.b16 %v380
        %v904 = vunpack.c.l.b16 %v381
        %v905 = vpack.c.b16 %v902, %v901
        %v906 = vpack.c.b16 %v904, %v903
        %909 = vmatprep.subr.bf16.mxu0 0
        %910 = vmatpush1.bf16.msra.mxu0 %v905
        %911 = vmatprep.subr.bf16.mxu0 0
        %912 = vmatpush1.bf16.msra.mxu0 %v906
        %913 = vmatprep.subr.bf16.mxu0 0
        %914 = vmatpush1.bf16.msra.mxu0 0
        %915 = vmatprep.subr.bf16.mxu0 0
        %916 = vmatpush1.bf16.msra.mxu0 0
        %917 = vmatprep.subr.bf16.mxu0 0
        %918 = vmatpush1.bf16.msra.mxu0 0
        %919 = vmatprep.subr.bf16.mxu0 0
        %920 = vmatpush1.bf16.msra.mxu0 0
        %921 = vmatprep.subr.bf16.mxu0 0
        %922 = vmatpush1.bf16.msra.mxu0 0
        %923 = vmatprep.subr.bf16.mxu0 0
        %924 = vmatpush1.bf16.msra.mxu0 0
        %925 = vmatprep.subr.bf16.mxu0 0
        %926 = vmatpush1.bf16.msra.mxu0 0
        %927 = vmatprep.subr.bf16.mxu0 0
        %928 = vmatpush1.bf16.msra.mxu0 0
        %929 = vmatprep.subr.bf16.mxu0 0
        %930 = vmatpush1.bf16.msra.mxu0 0
        %931 = vmatprep.subr.bf16.mxu0 0
        %932 = vmatpush1.bf16.msra.mxu0 0
        %933 = vmatprep.subr.bf16.mxu0 0
        %934 = vmatpush1.bf16.msra.mxu0 0
        %935 = vmatprep.subr.bf16.mxu0 0
        %936 = vmatpush1.bf16.msra.mxu0 0
        %937 = vmatprep.subr.bf16.mxu0 0
        %938 = vmatpush1.bf16.msra.mxu0 0
        %939 = vmatprep.subr.bf16.mxu0 0
        %940 = vmatpush1.bf16.msra.mxu0 0
        %941 = vmatprep.mubr.bf16.mxu0 0
        %942 = vmatmul.mubr.bf16.gmra.mrb[0].mxu0 %v491
        %v943 = vpop.f32.mrb[0].mxu0
        %v944 = vadd.f32 %v453, %v943
        %v945 = vpop.f32.mrb[0].mxu0
        %v946 = vpop.f32.mrb[0].mxu0
        %v947 = vpop.f32.mrb[0].mxu0
        %948 = vdwg.mxu0
        %v953 = vunpack.c.l.b16 %v382
        %v954 = vunpack.c.l.b16 %v383
        %v955 = vunpack.c.l.b16 %v384
        %v956 = vunpack.c.l.b16 %v385
        %v957 = vpack.c.b16 %v954, %v953
        %v958 = vpack.c.b16 %v956, %v955
        %961 = vmatprep.subr.bf16.mxu0 0
        %962 = vmatpush1.bf16.msra.mxu0 %v957
        %963 = vmatprep.subr.bf16.mxu0 0
        %964 = vmatpush1.bf16.msra.mxu0 %v958
        %965 = vmatprep.subr.bf16.mxu0 0
        %966 = vmatpush1.bf16.msra.mxu0 0
        %967 = vmatprep.subr.bf16.mxu0 0
        %968 = vmatpush1.bf16.msra.mxu0 0
        %969 = vmatprep.subr.bf16.mxu0 0
        %970 = vmatpush1.bf16.msra.mxu0 0
        %971 = vmatprep.subr.bf16.mxu0 0
        %972 = vmatpush1.bf16.msra.mxu0 0
        %973 = vmatprep.subr.bf16.mxu0 0
        %974 = vmatpush1.bf16.msra.mxu0 0
        %975 = vmatprep.subr.bf16.mxu0 0
        %976 = vmatpush1.bf16.msra.mxu0 0
        %977 = vmatprep.subr.bf16.mxu0 0
        %978 = vmatpush1.bf16.msra.mxu0 0
        %979 = vmatprep.subr.bf16.mxu0 0
        %980 = vmatpush1.bf16.msra.mxu0 0
        %981 = vmatprep.subr.bf16.mxu0 0
        %982 = vmatpush1.bf16.msra.mxu0 0
        %983 = vmatprep.subr.bf16.mxu0 0
        %984 = vmatpush1.bf16.msra.mxu0 0
        %985 = vmatprep.subr.bf16.mxu0 0
        %986 = vmatpush1.bf16.msra.mxu0 0
        %987 = vmatprep.subr.bf16.mxu0 0
        %988 = vmatpush1.bf16.msra.mxu0 0
        %989 = vmatprep.subr.bf16.mxu0 0
        %990 = vmatpush1.bf16.msra.mxu0 0
        %991 = vmatprep.subr.bf16.mxu0 0
        %992 = vmatpush1.bf16.msra.mxu0 0
        %993 = vmatprep.mubr.bf16.mxu0 0
        %994 = vmatmul.mubr.bf16.gmra.mrb[0].mxu0 %v491
        %v995 = vpop.f32.mrb[0].mxu0
        %v996 = vadd.f32 %v457, %v995
        %v997 = vpop.f32.mrb[0].mxu0
        %v998 = vpop.f32.mrb[0].mxu0
        %v999 = vpop.f32.mrb[0].mxu0
        %1000 = vdwg.mxu0
        %v1005 = vunpack.c.l.b16 %v386
        %v1006 = vunpack.c.l.b16 %v387
        %v1007 = vunpack.c.l.b16 %v388
        %v1008 = vunpack.c.l.b16 %v389
        %v1009 = vpack.c.b16 %v1006, %v1005
        %v1010 = vpack.c.b16 %v1008, %v1007
        %1013 = vmatprep.subr.bf16.mxu0 0
        %1014 = vmatpush1.bf16.msra.mxu0 %v1009
        %1015 = vmatprep.subr.bf16.mxu0 0
        %1016 = vmatpush1.bf16.msra.mxu0 %v1010
        %1017 = vmatprep.subr.bf16.mxu0 0
        %1018 = vmatpush1.bf16.msra.mxu0 0
        %1019 = vmatprep.subr.bf16.mxu0 0
        %1020 = vmatpush1.bf16.msra.mxu0 0
        %1021 = vmatprep.subr.bf16.mxu0 0
        %1022 = vmatpush1.bf16.msra.mxu0 0
        %1023 = vmatprep.subr.bf16.mxu0 0
        %1024 = vmatpush1.bf16.msra.mxu0 0
        %1025 = vmatprep.subr.bf16.mxu0 0
        %1026 = vmatpush1.bf16.msra.mxu0 0
        %1027 = vmatprep.subr.bf16.mxu0 0
        %1028 = vmatpush1.bf16.msra.mxu0 0
        %1029 = vmatprep.subr.bf16.mxu0 0
        %1030 = vmatpush1.bf16.msra.mxu0 0
        %1031 = vmatprep.subr.bf16.mxu0 0
        %1032 = vmatpush1.bf16.msra.mxu0 0
        %1033 = vmatprep.subr.bf16.mxu0 0
        %1034 = vmatpush1.bf16.msra.mxu0 0
        %1035 = vmatprep.subr.bf16.mxu0 0
        %1036 = vmatpush1.bf16.msra.mxu0 0
        %1037 = vmatprep.subr.bf16.mxu0 0
        %1038 = vmatpush1.bf16.msra.mxu0 0
        %1039 = vmatprep.subr.bf16.mxu0 0
        %1040 = vmatpush1.bf16.msra.mxu0 0
        %1041 = vmatprep.subr.bf16.mxu0 0
        %1042 = vmatpush1.bf16.msra.mxu0 0
        %1043 = vmatprep.subr.bf16.mxu0 0
        %1044 = vmatpush1.bf16.msra.mxu0 0
        %1045 = vmatprep.mubr.bf16.mxu0 0
        %1046 = vmatmul.mubr.bf16.gmra.mrb[0].mxu0 %v491
        %v1047 = vpop.f32.mrb[0].mxu0
        %v1048 = vadd.f32 %v461, %v1047
        %v1049 = vpop.f32.mrb[0].mxu0
        %v1050 = vpop.f32.mrb[0].mxu0
        %v1051 = vpop.f32.mrb[0].mxu0
        %1052 = vdwg.mxu0
        %v1057 = vunpack.c.l.b16 %v390
        %v1058 = vunpack.c.l.b16 %v391
        %v1059 = vunpack.c.l.b16 %v392
        %v1060 = vunpack.c.l.b16 %v393
        %v1061 = vpack.c.b16 %v1058, %v1057
        %v1062 = vpack.c.b16 %v1060, %v1059
        %1065 = vmatprep.subr.bf16.mxu0 0
        %1066 = vmatpush1.bf16.msra.mxu0 %v1061
        %1067 = vmatprep.subr.bf16.mxu0 0
        %1068 = vmatpush1.bf16.msra.mxu0 %v1062
        %1069 = vmatprep.subr.bf16.mxu0 0
        %1070 = vmatpush1.bf16.msra.mxu0 0
        %1071 = vmatprep.subr.bf16.mxu0 0
        %1072 = vmatpush1.bf16.msra.mxu0 0
        %1073 = vmatprep.subr.bf16.mxu0 0
        %1074 = vmatpush1.bf16.msra.mxu0 0
        %1075 = vmatprep.subr.bf16.mxu0 0
        %1076 = vmatpush1.bf16.msra.mxu0 0
        %1077 = vmatprep.subr.bf16.mxu0 0
        %1078 = vmatpush1.bf16.msra.mxu0 0
        %1079 = vmatprep.subr.bf16.mxu0 0
        %1080 = vmatpush1.bf16.msra.mxu0 0
        %1081 = vmatprep.subr.bf16.mxu0 0
        %1082 = vmatpush1.bf16.msra.mxu0 0
        %1083 = vmatprep.subr.bf16.mxu0 0
        %1084 = vmatpush1.bf16.msra.mxu0 0
        %1085 = vmatprep.subr.bf16.mxu0 0
        %1086 = vmatpush1.bf16.msra.mxu0 0
        %1087 = vmatprep.subr.bf16.mxu0 0
        %1088 = vmatpush1.bf16.msra.mxu0 0
        %1089 = vmatprep.subr.bf16.mxu0 0
        %1090 = vmatpush1.bf16.msra.mxu0 0
        %1091 = vmatprep.subr.bf16.mxu0 0
        %1092 = vmatpush1.bf16.msra.mxu0 0
        %1093 = vmatprep.subr.bf16.mxu0 0
        %1094 = vmatpush1.bf16.msra.mxu0 0
        %1095 = vmatprep.subr.bf16.mxu0 0
        %1096 = vmatpush1.bf16.msra.mxu0 0
        %1097 = vmatprep.mubr.bf16.mxu0 0
        %1098 = vmatmul.mubr.bf16.gmra.mrb[0].mxu0 %v491
        %v1099 = vpop.f32.mrb[0].mxu0
        %v1100 = vadd.f32 %v465, %v1099
        %v1101 = vpop.f32.mrb[0].mxu0
        %v1102 = vpop.f32.mrb[0].mxu0
        %v1103 = vpop.f32.mrb[0].mxu0
        %1104 = vdwg.mxu0
        %v1105 = vpack.c.bf16 %v528, %v528
        %v1106 = vpack.c.bf16 %v580, %v580
        %v1107 = vpack.c.bf16 %v632, %v632
        %v1108 = vpack.c.bf16 %v684, %v684
        %v1109 = vpack.c.bf16 %v736, %v736
        %v1110 = vpack.c.bf16 %v788, %v788
        %v1111 = vpack.c.bf16 %v840, %v840
        %v1112 = vpack.c.bf16 %v892, %v892
        %v1113 = vpack.c.bf16 %v944, %v944
        %v1114 = vpack.c.bf16 %v996, %v996
        %v1115 = vpack.c.bf16 %v1048, %v1048
        %v1116 = vpack.c.bf16 %v1100, %v1100
        %vm1117 = vcmask 64512
        %v1119 = vsel %vm1117, %v1105, 0
        %v1122 = vsel %vm1117, %v1109, 0
        %1124 = vmatprep.subr.bf16.mxu0 0
        %1125 = vmatpush1.bf16.xpose.msra.mxu0 %v1122
        %1126 = vmatprep.subr.bf16.mxu0 0
        %1127 = vmatpush1.bf16.xpose.msra.mxu0 0
        %1128 = vmatprep.subr.bf16.mxu0 0
        %1129 = vmatpush1.bf16.xpose.msra.mxu0 0
        %1130 = vmatprep.subr.bf16.mxu0 0
        %1131 = vmatpush1.bf16.xpose.msra.mxu0 0
        %1132 = vmatprep.subr.bf16.mxu0 0
        %1133 = vmatpush1.bf16.xpose.msra.mxu0 0
        %1134 = vmatprep.subr.bf16.mxu0 0
        %1135 = vmatpush1.bf16.xpose.msra.mxu0 0
        %1136 = vmatprep.subr.bf16.mxu0 0
        %1137 = vmatpush1.bf16.xpose.msra.mxu0 0
        %1138 = vmatprep.subr.bf16.mxu0 0
        %1139 = vmatpush1.bf16.xpose.msra.mxu0 0
        %1140 = vmatprep.subr.bf16.mxu0 0
        %1141 = vmatpush1.bf16.xpose.msra.mxu0 0
        %1142 = vmatprep.subr.bf16.mxu0 0
        %1143 = vmatpush1.bf16.xpose.msra.mxu0 0
        %1144 = vmatprep.subr.bf16.mxu0 0
        %1145 = vmatpush1.bf16.xpose.msra.mxu0 0
        %1146 = vmatprep.subr.bf16.mxu0 0
        %1147 = vmatpush1.bf16.xpose.msra.mxu0 0
        %1148 = vmatprep.subr.bf16.mxu0 0
        %1149 = vmatpush1.bf16.xpose.msra.mxu0 0
        %1150 = vmatprep.subr.bf16.mxu0 0
        %1151 = vmatpush1.bf16.xpose.msra.mxu0 0
        %1152 = vmatprep.subr.bf16.mxu0 0
        %1153 = vmatpush1.bf16.xpose.msra.mxu0 0
        %1154 = vmatprep.subr.bf16.mxu0 0
        %1155 = vmatpush1.bf16.xpose.msra.mxu0 0
        %1156 = vmatprep.mubr.bf16.mxu0 0
        %1157 = vmatmul.mubr.bf16.gmra.mrb[0].mxu0 %v1119
        %v1158 = vpop.f32.mrb[0].mxu0
        %v1159 = vadd.f32 0.0, %v1158
        %v1160 = vpop.f32.mrb[0].mxu0
        %v1161 = vpop.f32.mrb[0].mxu0
        %v1162 = vpop.f32.mrb[0].mxu0
        %1163 = vdwg.mxu0
        %v1165 = vsel %vm1117, %v1106, 0
        %v1168 = vsel %vm1117, %v1110, 0
        %1170 = vmatprep.subr.bf16.mxu0 0
        %1171 = vmatpush1.bf16.xpose.msra.mxu0 %v1168
        %1172 = vmatprep.subr.bf16.mxu0 0
        %1173 = vmatpush1.bf16.xpose.msra.mxu0 0
        %1174 = vmatprep.subr.bf16.mxu0 0
        %1175 = vmatpush1.bf16.xpose.msra.mxu0 0
        %1176 = vmatprep.subr.bf16.mxu0 0
        %1177 = vmatpush1.bf16.xpose.msra.mxu0 0
        %1178 = vmatprep.subr.bf16.mxu0 0
        %1179 = vmatpush1.bf16.xpose.msra.mxu0 0
        %1180 = vmatprep.subr.bf16.mxu0 0
        %1181 = vmatpush1.bf16.xpose.msra.mxu0 0
        %1182 = vmatprep.subr.bf16.mxu0 0
        %1183 = vmatpush1.bf16.xpose.msra.mxu0 0
        %1184 = vmatprep.subr.bf16.mxu0 0
        %1185 = vmatpush1.bf16.xpose.msra.mxu0 0
        %1186 = vmatprep.subr.bf16.mxu0 0
        %1187 = vmatpush1.bf16.xpose.msra.mxu0 0
        %1188 = vmatprep.subr.bf16.mxu0 0
        %1189 = vmatpush1.bf16.xpose.msra.mxu0 0
        %1190 = vmatprep.subr.bf16.mxu0 0
        %1191 = vmatpush1.bf16.xpose.msra.mxu0 0
        %1192 = vmatprep.subr.bf16.mxu0 0
        %1193 = vmatpush1.bf16.xpose.msra.mxu0 0
        %1194 = vmatprep.subr.bf16.mxu0 0
        %1195 = vmatpush1.bf16.xpose.msra.mxu0 0
        %1196 = vmatprep.subr.bf16.mxu0 0
        %1197 = vmatpush1.bf16.xpose.msra.mxu0 0
        %1198 = vmatprep.subr.bf16.mxu0 0
        %1199 = vmatpush1.bf16.xpose.msra.mxu0 0
        %1200 = vmatprep.subr.bf16.mxu0 0
        %1201 = vmatpush1.bf16.xpose.msra.mxu0 0
        %1202 = vmatprep.mubr.bf16.mxu0 0
        %1203 = vmatmul.mubr.bf16.gmra.mrb[0].mxu0 %v1165
        %v1204 = vpop.f32.mrb[0].mxu0
        %v1205 = vadd.f32 0.0, %v1204
        %v1206 = vpop.f32.mrb[0].mxu0
        %v1207 = vpop.f32.mrb[0].mxu0
        %v1208 = vpop.f32.mrb[0].mxu0
        %1209 = vdwg.mxu0
        %v1211 = vsel %vm1117, %v1107, 0
        %v1214 = vsel %vm1117, %v1111, 0
        %1216 = vmatprep.subr.bf16.mxu0 0
        %1217 = vmatpush1.bf16.xpose.msra.mxu0 %v1214
        %1218 = vmatprep.subr.bf16.mxu0 0
        %1219 = vmatpush1.bf16.xpose.msra.mxu0 0
        %1220 = vmatprep.subr.bf16.mxu0 0
        %1221 = vmatpush1.bf16.xpose.msra.mxu0 0
        %1222 = vmatprep.subr.bf16.mxu0 0
        %1223 = vmatpush1.bf16.xpose.msra.mxu0 0
        %1224 = vmatprep.subr.bf16.mxu0 0
        %1225 = vmatpush1.bf16.xpose.msra.mxu0 0
        %1226 = vmatprep.subr.bf16.mxu0 0
        %1227 = vmatpush1.bf16.xpose.msra.mxu0 0
        %1228 = vmatprep.subr.bf16.mxu0 0
        %1229 = vmatpush1.bf16.xpose.msra.mxu0 0
        %1230 = vmatprep.subr.bf16.mxu0 0
        %1231 = vmatpush1.bf16.xpose.msra.mxu0 0
        %1232 = vmatprep.subr.bf16.mxu0 0
        %1233 = vmatpush1.bf16.xpose.msra.mxu0 0
        %1234 = vmatprep.subr.bf16.mxu0 0
        %1235 = vmatpush1.bf16.xpose.msra.mxu0 0
        %1236 = vmatprep.subr.bf16.mxu0 0
        %1237 = vmatpush1.bf16.xpose.msra.mxu0 0
        %1238 = vmatprep.subr.bf16.mxu0 0
        %1239 = vmatpush1.bf16.xpose.msra.mxu0 0
        %1240 = vmatprep.subr.bf16.mxu0 0
        %1241 = vmatpush1.bf16.xpose.msra.mxu0 0
        %1242 = vmatprep.subr.bf16.mxu0 0
        %1243 = vmatpush1.bf16.xpose.msra.mxu0 0
        %1244 = vmatprep.subr.bf16.mxu0 0
        %1245 = vmatpush1.bf16.xpose.msra.mxu0 0
        %1246 = vmatprep.subr.bf16.mxu0 0
        %1247 = vmatpush1.bf16.xpose.msra.mxu0 0
        %1248 = vmatprep.mubr.bf16.mxu0 0
        %1249 = vmatmul.mubr.bf16.gmra.mrb[0].mxu0 %v1211
        %v1250 = vpop.f32.mrb[0].mxu0
        %v1251 = vadd.f32 0.0, %v1250
        %v1252 = vpop.f32.mrb[0].mxu0
        %v1253 = vpop.f32.mrb[0].mxu0
        %v1254 = vpop.f32.mrb[0].mxu0
        %1255 = vdwg.mxu0
        %v1257 = vsel %vm1117, %v1108, 0
        %v1260 = vsel %vm1117, %v1112, 0
        %1262 = vmatprep.subr.bf16.mxu0 0
        %1263 = vmatpush1.bf16.xpose.msra.mxu0 %v1260
        %1264 = vmatprep.subr.bf16.mxu0 0
        %1265 = vmatpush1.bf16.xpose.msra.mxu0 0
        %1266 = vmatprep.subr.bf16.mxu0 0
        %1267 = vmatpush1.bf16.xpose.msra.mxu0 0
        %1268 = vmatprep.subr.bf16.mxu0 0
        %1269 = vmatpush1.bf16.xpose.msra.mxu0 0
        %1270 = vmatprep.subr.bf16.mxu0 0
        %1271 = vmatpush1.bf16.xpose.msra.mxu0 0
        %1272 = vmatprep.subr.bf16.mxu0 0
        %1273 = vmatpush1.bf16.xpose.msra.mxu0 0
        %1274 = vmatprep.subr.bf16.mxu0 0
        %1275 = vmatpush1.bf16.xpose.msra.mxu0 0
        %1276 = vmatprep.subr.bf16.mxu0 0
        %1277 = vmatpush1.bf16.xpose.msra.mxu0 0
        %1278 = vmatprep.subr.bf16.mxu0 0
        %1279 = vmatpush1.bf16.xpose.msra.mxu0 0
        %1280 = vmatprep.subr.bf16.mxu0 0
        %1281 = vmatpush1.bf16.xpose.msra.mxu0 0
        %1282 = vmatprep.subr.bf16.mxu0 0
        %1283 = vmatpush1.bf16.xpose.msra.mxu0 0
        %1284 = vmatprep.subr.bf16.mxu0 0
        %1285 = vmatpush1.bf16.xpose.msra.mxu0 0
        %1286 = vmatprep.subr.bf16.mxu0 0
        %1287 = vmatpush1.bf16.xpose.msra.mxu0 0
        %1288 = vmatprep.subr.bf16.mxu0 0
        %1289 = vmatpush1.bf16.xpose.msra.mxu0 0
        %1290 = vmatprep.subr.bf16.mxu0 0
        %1291 = vmatpush1.bf16.xpose.msra.mxu0 0
        %1292 = vmatprep.subr.bf16.mxu0 0
        %1293 = vmatpush1.bf16.xpose.msra.mxu0 0
        %1294 = vmatprep.mubr.bf16.mxu0 0
        %1295 = vmatmul.mubr.bf16.gmra.mrb[0].mxu0 %v1257
        %v1296 = vpop.f32.mrb[0].mxu0
        %v1297 = vadd.f32 0.0, %v1296
        %v1298 = vpop.f32.mrb[0].mxu0
        %v1299 = vpop.f32.mrb[0].mxu0
        %v1300 = vpop.f32.mrb[0].mxu0
        %1301 = vdwg.mxu0
        %v1302 = vsel %vm1117, %v1159, -inf
        %1303 = vmax.xlane.f32.xlu0 %v1302
        %v1304 = vpop.xlane.xlu0 %1303
        %v1305 = vsel %vm1117, %v1205, -inf
        %1306 = vmax.xlane.f32.xlu0 %v1305
        %v1307 = vpop.xlane.xlu0 %1306
        %v1308 = vsel %vm1117, %v1251, -inf
        %1309 = vmax.xlane.f32.xlu0 %v1308
        %v1310 = vpop.xlane.xlu0 %1309
        %v1311 = vsel %vm1117, %v1297, -inf
        %1312 = vmax.xlane.f32.xlu0 %v1311
        %v1313 = vpop.xlane.xlu0 %1312
        %v1314 = vsub.f32 %v1159, %v1304
        %v1315 = vsub.f32 %v1205, %v1307
        %v1316 = vsub.f32 %v1251, %v1310
        %v1317 = vsub.f32 %v1297, %v1313
        %v1318 = vmul.f32 %v1314, 1.442695
        %v1319 = vpow.pop %v1318
        %v1320 = vmul.f32 %v1315, 1.442695
        %v1321 = vpow.pop %v1320
        %v1322 = vmul.f32 %v1316, 1.442695
        %v1323 = vpow.pop %v1322
        %v1324 = vmul.f32 %v1317, 1.442695
        %v1325 = vpow.pop %v1324
        %v1326 = vsel %vm1117, %v1319, 0.0
        %1327 = vadd.xlane.f32.xlu0 %v1326
        %v1328 = vpop.xlane.xlu0 %1327
        %v1329 = vsel %vm1117, %v1321, 0.0
        %1330 = vadd.xlane.f32.xlu0 %v1329
        %v1331 = vpop.xlane.xlu0 %1330
        %v1332 = vsel %vm1117, %v1323, 0.0
        %1333 = vadd.xlane.f32.xlu0 %v1332
        %v1334 = vpop.xlane.xlu0 %1333
        %v1335 = vsel %vm1117, %v1325, 0.0
        %1336 = vadd.xlane.f32.xlu0 %v1335
        %v1337 = vpop.xlane.xlu0 %1336
        %v1338 = vrcp.pop %v1328
        %v1339 = vrcp.pop %v1331
        %v1340 = vrcp.pop %v1334
        %v1341 = vrcp.pop %v1337
        %v1342 = vmul.f32 %v1319, %v1338
        %v1343 = vmul.f32 %v1321, %v1339
        %v1344 = vmul.f32 %v1323, %v1340
        %v1345 = vmul.f32 %v1325, %v1341
        %v1346 = vpack.c.bf16 %v1342, %v1342
        %v1347 = vpack.c.bf16 %v1343, %v1343
        %v1348 = vpack.c.bf16 %v1344, %v1344
        %v1349 = vpack.c.bf16 %v1345, %v1345
        %v1351 = vsel %vm1117, %v1346, 0
        %vm1353 = vcmask 1043456
        %v1355 = vsel %vm1353, %v1113, 0
        %1357 = vmatprep.subr.bf16.mxu0 0
        %1358 = vmatpush1.bf16.msra.mxu0 %v1355
        %1359 = vmatprep.subr.bf16.mxu0 0
        %1360 = vmatpush1.bf16.msra.mxu0 0
        %1361 = vmatprep.subr.bf16.mxu0 0
        %1362 = vmatpush1.bf16.msra.mxu0 0
        %1363 = vmatprep.subr.bf16.mxu0 0
        %1364 = vmatpush1.bf16.msra.mxu0 0
        %1365 = vmatprep.subr.bf16.mxu0 0
        %1366 = vmatpush1.bf16.msra.mxu0 0
        %1367 = vmatprep.subr.bf16.mxu0 0
        %1368 = vmatpush1.bf16.msra.mxu0 0
        %1369 = vmatprep.subr.bf16.mxu0 0
        %1370 = vmatpush1.bf16.msra.mxu0 0
        %1371 = vmatprep.subr.bf16.mxu0 0
        %1372 = vmatpush1.bf16.msra.mxu0 0
        %1373 = vmatprep.subr.bf16.mxu0 0
        %1374 = vmatpush1.bf16.msra.mxu0 0
        %1375 = vmatprep.subr.bf16.mxu0 0
        %1376 = vmatpush1.bf16.msra.mxu0 0
        %1377 = vmatprep.subr.bf16.mxu0 0
        %1378 = vmatpush1.bf16.msra.mxu0 0
        %1379 = vmatprep.subr.bf16.mxu0 0
        %1380 = vmatpush1.bf16.msra.mxu0 0
        %1381 = vmatprep.subr.bf16.mxu0 0
        %1382 = vmatpush1.bf16.msra.mxu0 0
        %1383 = vmatprep.subr.bf16.mxu0 0
        %1384 = vmatpush1.bf16.msra.mxu0 0
        %1385 = vmatprep.subr.bf16.mxu0 0
        %1386 = vmatpush1.bf16.msra.mxu0 0
        %1387 = vmatprep.subr.bf16.mxu0 0
        %1388 = vmatpush1.bf16.msra.mxu0 0
        %1389 = vmatprep.mubr.bf16.mxu0 0
        %1390 = vmatmul.mubr.bf16.gmra.mrb[0].mxu0 %v1351
        %v1391 = vpop.f32.mrb[0].mxu0
        %v1392 = vadd.f32 0.0, %v1391
        %v1393 = vpop.f32.mrb[0].mxu0
        %v1394 = vpop.f32.mrb[0].mxu0
        %v1395 = vpop.f32.mrb[0].mxu0
        %1396 = vdwg.mxu0
        %v1398 = vsel %vm1117, %v1347, 0
        %v1401 = vsel %vm1353, %v1114, 0
        %1403 = vmatprep.subr.bf16.mxu0 0
        %1404 = vmatpush1.bf16.msra.mxu0 %v1401
        %1405 = vmatprep.subr.bf16.mxu0 0
        %1406 = vmatpush1.bf16.msra.mxu0 0
        %1407 = vmatprep.subr.bf16.mxu0 0
        %1408 = vmatpush1.bf16.msra.mxu0 0
        %1409 = vmatprep.subr.bf16.mxu0 0
        %1410 = vmatpush1.bf16.msra.mxu0 0
        %1411 = vmatprep.subr.bf16.mxu0 0
        %1412 = vmatpush1.bf16.msra.mxu0 0
        %1413 = vmatprep.subr.bf16.mxu0 0
        %1414 = vmatpush1.bf16.msra.mxu0 0
        %1415 = vmatprep.subr.bf16.mxu0 0
        %1416 = vmatpush1.bf16.msra.mxu0 0
        %1417 = vmatprep.subr.bf16.mxu0 0
        %1418 = vmatpush1.bf16.msra.mxu0 0
        %1419 = vmatprep.subr.bf16.mxu0 0
        %1420 = vmatpush1.bf16.msra.mxu0 0
        %1421 = vmatprep.subr.bf16.mxu0 0
        %1422 = vmatpush1.bf16.msra.mxu0 0
        %1423 = vmatprep.subr.bf16.mxu0 0
        %1424 = vmatpush1.bf16.msra.mxu0 0
        %1425 = vmatprep.subr.bf16.mxu0 0
        %1426 = vmatpush1.bf16.msra.mxu0 0
        %1427 = vmatprep.subr.bf16.mxu0 0
        %1428 = vmatpush1.bf16.msra.mxu0 0
        %1429 = vmatprep.subr.bf16.mxu0 0
        %1430 = vmatpush1.bf16.msra.mxu0 0
        %1431 = vmatprep.subr.bf16.mxu0 0
        %1432 = vmatpush1.bf16.msra.mxu0 0
        %1433 = vmatprep.subr.bf16.mxu0 0
        %1434 = vmatpush1.bf16.msra.mxu0 0
        %1435 = vmatprep.mubr.bf16.mxu0 0
        %1436 = vmatmul.mubr.bf16.gmra.mrb[0].mxu0 %v1398
        %v1437 = vpop.f32.mrb[0].mxu0
        %v1438 = vadd.f32 0.0, %v1437
        %v1439 = vpop.f32.mrb[0].mxu0
        %v1440 = vpop.f32.mrb[0].mxu0
        %v1441 = vpop.f32.mrb[0].mxu0
        %1442 = vdwg.mxu0
        %v1444 = vsel %vm1117, %v1348, 0
        %v1447 = vsel %vm1353, %v1115, 0
        %1449 = vmatprep.subr.bf16.mxu0 0
        %1450 = vmatpush1.bf16.msra.mxu0 %v1447
        %1451 = vmatprep.subr.bf16.mxu0 0
        %1452 = vmatpush1.bf16.msra.mxu0 0
        %1453 = vmatprep.subr.bf16.mxu0 0
        %1454 = vmatpush1.bf16.msra.mxu0 0
        %1455 = vmatprep.subr.bf16.mxu0 0
        %1456 = vmatpush1.bf16.msra.mxu0 0
        %1457 = vmatprep.subr.bf16.mxu0 0
        %1458 = vmatpush1.bf16.msra.mxu0 0
        %1459 = vmatprep.subr.bf16.mxu0 0
        %1460 = vmatpush1.bf16.msra.mxu0 0
        %1461 = vmatprep.subr.bf16.mxu0 0
        %1462 = vmatpush1.bf16.msra.mxu0 0
        %1463 = vmatprep.subr.bf16.mxu0 0
        %1464 = vmatpush1.bf16.msra.mxu0 0
        %1465 = vmatprep.subr.bf16.mxu0 0
        %1466 = vmatpush1.bf16.msra.mxu0 0
        %1467 = vmatprep.subr.bf16.mxu0 0
        %1468 = vmatpush1.bf16.msra.mxu0 0
        %1469 = vmatprep.subr.bf16.mxu0 0
        %1470 = vmatpush1.bf16.msra.mxu0 0
        %1471 = vmatprep.subr.bf16.mxu0 0
        %1472 = vmatpush1.bf16.msra.mxu0 0
        %1473 = vmatprep.subr.bf16.mxu0 0
        %1474 = vmatpush1.bf16.msra.mxu0 0
        %1475 = vmatprep.subr.bf16.mxu0 0
        %1476 = vmatpush1.bf16.msra.mxu0 0
        %1477 = vmatprep.subr.bf16.mxu0 0
        %1478 = vmatpush1.bf16.msra.mxu0 0
        %1479 = vmatprep.subr.bf16.mxu0 0
        %1480 = vmatpush1.bf16.msra.mxu0 0
        %1481 = vmatprep.mubr.bf16.mxu0 0
        %1482 = vmatmul.mubr.bf16.gmra.mrb[0].mxu0 %v1444
        %v1483 = vpop.f32.mrb[0].mxu0
        %v1484 = vadd.f32 0.0, %v1483
        %v1485 = vpop.f32.mrb[0].mxu0
        %v1486 = vpop.f32.mrb[0].mxu0
        %v1487 = vpop.f32.mrb[0].mxu0
        %1488 = vdwg.mxu0
        %v1490 = vsel %vm1117, %v1349, 0
        %v1493 = vsel %vm1353, %v1116, 0
        %1495 = vmatprep.subr.bf16.mxu0 0
        %1496 = vmatpush1.bf16.msra.mxu0 %v1493
        %1497 = vmatprep.subr.bf16.mxu0 0
        %1498 = vmatpush1.bf16.msra.mxu0 0
        %1499 = vmatprep.subr.bf16.mxu0 0
        %1500 = vmatpush1.bf16.msra.mxu0 0
        %1501 = vmatprep.subr.bf16.mxu0 0
        %1502 = vmatpush1.bf16.msra.mxu0 0
        %1503 = vmatprep.subr.bf16.mxu0 0
        %1504 = vmatpush1.bf16.msra.mxu0 0
        %1505 = vmatprep.subr.bf16.mxu0 0
        %1506 = vmatpush1.bf16.msra.mxu0 0
        %1507 = vmatprep.subr.bf16.mxu0 0
        %1508 = vmatpush1.bf16.msra.mxu0 0
        %1509 = vmatprep.subr.bf16.mxu0 0
        %1510 = vmatpush1.bf16.msra.mxu0 0
        %1511 = vmatprep.subr.bf16.mxu0 0
        %1512 = vmatpush1.bf16.msra.mxu0 0
        %1513 = vmatprep.subr.bf16.mxu0 0
        %1514 = vmatpush1.bf16.msra.mxu0 0
        %1515 = vmatprep.subr.bf16.mxu0 0
        %1516 = vmatpush1.bf16.msra.mxu0 0
        %1517 = vmatprep.subr.bf16.mxu0 0
        %1518 = vmatpush1.bf16.msra.mxu0 0
        %1519 = vmatprep.subr.bf16.mxu0 0
        %1520 = vmatpush1.bf16.msra.mxu0 0
        %1521 = vmatprep.subr.bf16.mxu0 0
        %1522 = vmatpush1.bf16.msra.mxu0 0
        %1523 = vmatprep.subr.bf16.mxu0 0
        %1524 = vmatpush1.bf16.msra.mxu0 0
        %1525 = vmatprep.subr.bf16.mxu0 0
        %1526 = vmatpush1.bf16.msra.mxu0 0
        %1527 = vmatprep.mubr.bf16.mxu0 0
        %1528 = vmatmul.mubr.bf16.gmra.mrb[0].mxu0 %v1490
        %v1529 = vpop.f32.mrb[0].mxu0
        %v1530 = vadd.f32 0.0, %v1529
        %v1531 = vpop.f32.mrb[0].mxu0
        %v1532 = vpop.f32.mrb[0].mxu0
        %v1533 = vpop.f32.mrb[0].mxu0
        %1534 = vdwg.mxu0
        %v1535 = vpack.c.bf16 %v1392, %v1392
        %v1536 = vpack.c.bf16 %v1438, %v1438
        %v1537 = vpack.c.bf16 %v1484, %v1484
        %v1538 = vpack.c.bf16 %v1530, %v1530
        %v1539 = vld [vmem:[%s3] sm:$0xf]
        %v1540 = vld [vmem:[%s3 + $0x4] sm:$0xf]
        %v1541 = vld [vmem:[%s3 + $0x8] sm:$0xf]
        %v1542 = vld [vmem:[%s3 + $0xc] sm:$0xf]
        %v1544 = vsel %vm1117, %v1535, 0
        %v1547 = vsel %vm1353, %v1539, 0
        %1549 = vmatprep.subr.bf16.mxu0 0
        %1550 = vmatpush1.bf16.msra.mxu0 %v1547
        %1551 = vmatprep.subr.bf16.mxu0 0
        %1552 = vmatpush1.bf16.msra.mxu0 0
        %1553 = vmatprep.subr.bf16.mxu0 0
        %1554 = vmatpush1.bf16.msra.mxu0 0
        %1555 = vmatprep.subr.bf16.mxu0 0
        %1556 = vmatpush1.bf16.msra.mxu0 0
        %1557 = vmatprep.subr.bf16.mxu0 0
        %1558 = vmatpush1.bf16.msra.mxu0 0
        %1559 = vmatprep.subr.bf16.mxu0 0
        %1560 = vmatpush1.bf16.msra.mxu0 0
        %1561 = vmatprep.subr.bf16.mxu0 0
        %1562 = vmatpush1.bf16.msra.mxu0 0
        %1563 = vmatprep.subr.bf16.mxu0 0
        %1564 = vmatpush1.bf16.msra.mxu0 0
        %1565 = vmatprep.subr.bf16.mxu0 0
        %1566 = vmatpush1.bf16.msra.mxu0 0
        %1567 = vmatprep.subr.bf16.mxu0 0
        %1568 = vmatpush1.bf16.msra.mxu0 0
        %1569 = vmatprep.subr.bf16.mxu0 0
        %1570 = vmatpush1.bf16.msra.mxu0 0
        %1571 = vmatprep.subr.bf16.mxu0 0
        %1572 = vmatpush1.bf16.msra.mxu0 0
        %1573 = vmatprep.subr.bf16.mxu0 0
        %1574 = vmatpush1.bf16.msra.mxu0 0
        %1575 = vmatprep.subr.bf16.mxu0 0
        %1576 = vmatpush1.bf16.msra.mxu0 0
        %1577 = vmatprep.subr.bf16.mxu0 0
        %1578 = vmatpush1.bf16.msra.mxu0 0
        %1579 = vmatprep.subr.bf16.mxu0 0
        %1580 = vmatpush1.bf16.msra.mxu0 0
        %1581 = vmatprep.mubr.bf16.mxu0 0
        %1582 = vmatmul.mubr.bf16.gmra.mrb[0].mxu0 %v1544
        %v1583 = vpop.f32.mrb[0].mxu0
        %v1584 = vadd.f32 0.0, %v1583
        %v1585 = vpop.f32.mrb[0].mxu0
        %v1586 = vpop.f32.mrb[0].mxu0
        %v1587 = vpop.f32.mrb[0].mxu0
        %1588 = vdwg.mxu0
        %v1590 = vsel %vm1117, %v1536, 0
        %v1593 = vsel %vm1353, %v1540, 0
        %1595 = vmatprep.subr.bf16.mxu0 0
        %1596 = vmatpush1.bf16.msra.mxu0 %v1593
        %1597 = vmatprep.subr.bf16.mxu0 0
        %1598 = vmatpush1.bf16.msra.mxu0 0
        %1599 = vmatprep.subr.bf16.mxu0 0
        %1600 = vmatpush1.bf16.msra.mxu0 0
        %1601 = vmatprep.subr.bf16.mxu0 0
        %1602 = vmatpush1.bf16.msra.mxu0 0
        %1603 = vmatprep.subr.bf16.mxu0 0
        %1604 = vmatpush1.bf16.msra.mxu0 0
        %1605 = vmatprep.subr.bf16.mxu0 0
        %1606 = vmatpush1.bf16.msra.mxu0 0
        %1607 = vmatprep.subr.bf16.mxu0 0
        %1608 = vmatpush1.bf16.msra.mxu0 0
        %1609 = vmatprep.subr.bf16.mxu0 0
        %1610 = vmatpush1.bf16.msra.mxu0 0
        %1611 = vmatprep.subr.bf16.mxu0 0
        %1612 = vmatpush1.bf16.msra.mxu0 0
        %1613 = vmatprep.subr.bf16.mxu0 0
        %1614 = vmatpush1.bf16.msra.mxu0 0
        %1615 = vmatprep.subr.bf16.mxu0 0
        %1616 = vmatpush1.bf16.msra.mxu0 0
        %1617 = vmatprep.subr.bf16.mxu0 0
        %1618 = vmatpush1.bf16.msra.mxu0 0
        %1619 = vmatprep.subr.bf16.mxu0 0
        %1620 = vmatpush1.bf16.msra.mxu0 0
        %1621 = vmatprep.subr.bf16.mxu0 0
        %1622 = vmatpush1.bf16.msra.mxu0 0
        %1623 = vmatprep.subr.bf16.mxu0 0
        %1624 = vmatpush1.bf16.msra.mxu0 0
        %1625 = vmatprep.subr.bf16.mxu0 0
        %1626 = vmatpush1.bf16.msra.mxu0 0
        %1627 = vmatprep.mubr.bf16.mxu0 0
        %1628 = vmatmul.mubr.bf16.gmra.mrb[0].mxu0 %v1590
        %v1629 = vpop.f32.mrb[0].mxu0
        %v1630 = vadd.f32 0.0, %v1629
        %v1631 = vpop.f32.mrb[0].mxu0
        %v1632 = vpop.f32.mrb[0].mxu0
        %v1633 = vpop.f32.mrb[0].mxu0
        %1634 = vdwg.mxu0
        %v1636 = vsel %vm1117, %v1537, 0
        %v1639 = vsel %vm1353, %v1541, 0
        %1641 = vmatprep.subr.bf16.mxu0 0
        %1642 = vmatpush1.bf16.msra.mxu0 %v1639
        %1643 = vmatprep.subr.bf16.mxu0 0
        %1644 = vmatpush1.bf16.msra.mxu0 0
        %1645 = vmatprep.subr.bf16.mxu0 0
        %1646 = vmatpush1.bf16.msra.mxu0 0
        %1647 = vmatprep.subr.bf16.mxu0 0
        %1648 = vmatpush1.bf16.msra.mxu0 0
        %1649 = vmatprep.subr.bf16.mxu0 0
        %1650 = vmatpush1.bf16.msra.mxu0 0
        %1651 = vmatprep.subr.bf16.mxu0 0
        %1652 = vmatpush1.bf16.msra.mxu0 0
        %1653 = vmatprep.subr.bf16.mxu0 0
        %1654 = vmatpush1.bf16.msra.mxu0 0
        %1655 = vmatprep.subr.bf16.mxu0 0
        %1656 = vmatpush1.bf16.msra.mxu0 0
        %1657 = vmatprep.subr.bf16.mxu0 0
        %1658 = vmatpush1.bf16.msra.mxu0 0
        %1659 = vmatprep.subr.bf16.mxu0 0
        %1660 = vmatpush1.bf16.msra.mxu0 0
        %1661 = vmatprep.subr.bf16.mxu0 0
        %1662 = vmatpush1.bf16.msra.mxu0 0
        %1663 = vmatprep.subr.bf16.mxu0 0
        %1664 = vmatpush1.bf16.msra.mxu0 0
        %1665 = vmatprep.subr.bf16.mxu0 0
        %1666 = vmatpush1.bf16.msra.mxu0 0
        %1667 = vmatprep.subr.bf16.mxu0 0
        %1668 = vmatpush1.bf16.msra.mxu0 0
        %1669 = vmatprep.subr.bf16.mxu0 0
        %1670 = vmatpush1.bf16.msra.mxu0 0
        %1671 = vmatprep.subr.bf16.mxu0 0
        %1672 = vmatpush1.bf16.msra.mxu0 0
        %1673 = vmatprep.mubr.bf16.mxu0 0
        %1674 = vmatmul.mubr.bf16.gmra.mrb[0].mxu0 %v1636
        %v1675 = vpop.f32.mrb[0].mxu0
        %v1676 = vadd.f32 0.0, %v1675
        %v1677 = vpop.f32.mrb[0].mxu0
        %v1678 = vpop.f32.mrb[0].mxu0
        %v1679 = vpop.f32.mrb[0].mxu0
        %1680 = vdwg.mxu0
        %v1682 = vsel %vm1117, %v1538, 0
        %v1685 = vsel %vm1353, %v1542, 0
        %1687 = vmatprep.subr.bf16.mxu0 0
        %1688 = vmatpush1.bf16.msra.mxu0 %v1685
        %1689 = vmatprep.subr.bf16.mxu0 0
        %1690 = vmatpush1.bf16.msra.mxu0 0
        %1691 = vmatprep.subr.bf16.mxu0 0
        %1692 = vmatpush1.bf16.msra.mxu0 0
        %1693 = vmatprep.subr.bf16.mxu0 0
        %1694 = vmatpush1.bf16.msra.mxu0 0
        %1695 = vmatprep.subr.bf16.mxu0 0
        %1696 = vmatpush1.bf16.msra.mxu0 0
        %1697 = vmatprep.subr.bf16.mxu0 0
        %1698 = vmatpush1.bf16.msra.mxu0 0
        %1699 = vmatprep.subr.bf16.mxu0 0
        %1700 = vmatpush1.bf16.msra.mxu0 0
        %1701 = vmatprep.subr.bf16.mxu0 0
        %1702 = vmatpush1.bf16.msra.mxu0 0
        %1703 = vmatprep.subr.bf16.mxu0 0
        %1704 = vmatpush1.bf16.msra.mxu0 0
        %1705 = vmatprep.subr.bf16.mxu0 0
        %1706 = vmatpush1.bf16.msra.mxu0 0
        %1707 = vmatprep.subr.bf16.mxu0 0
        %1708 = vmatpush1.bf16.msra.mxu0 0
        %1709 = vmatprep.subr.bf16.mxu0 0
        %1710 = vmatpush1.bf16.msra.mxu0 0
        %1711 = vmatprep.subr.bf16.mxu0 0
        %1712 = vmatpush1.bf16.msra.mxu0 0
        %1713 = vmatprep.subr.bf16.mxu0 0
        %1714 = vmatpush1.bf16.msra.mxu0 0
        %1715 = vmatprep.subr.bf16.mxu0 0
        %1716 = vmatpush1.bf16.msra.mxu0 0
        %1717 = vmatprep.subr.bf16.mxu0 0
        %1718 = vmatpush1.bf16.msra.mxu0 0
        %1719 = vmatprep.mubr.bf16.mxu0 0
        %1720 = vmatmul.mubr.bf16.gmra.mrb[0].mxu0 %v1682
        %v1721 = vpop.f32.mrb[0].mxu0
        %v1722 = vadd.f32 0.0, %v1721
        %v1723 = vpop.f32.mrb[0].mxu0
        %v1724 = vpop.f32.mrb[0].mxu0
        %v1725 = vpop.f32.mrb[0].mxu0
        %1726 = vdwg.mxu0
        %v1727 = vsel %vm330, %v1584, 0.0
        %v1728 = vsel %vm330, %v1630, 0.0
        %v1729 = vadd.f32 %v1727, %v1728
        %v1730 = vsel %vm330, %v1676, 0.0
        %v1731 = vadd.f32 %v1729, %v1730
        %v1732 = vsel %vm330, %v1722, 0.0
        %v1733 = vadd.f32 %v1731, %v1732
        %v1734 = vld [vmem:[%s4] sm:$0x1]
        %v1736 = vlaneseq
        %v1737 = vshrl.u32 %v1736, 7
        %v1738 = vsub.s32 0, %v1737
        %v1739 = vrot.slane %v1734, %v1738
        %v1741 = vadd.f32 %v1733, %v1739
        %v1742 = vadd.f32 %v329, %v1741
        %v1743 = vsel %vm330, %v1742, 0.0
        %1744 = vadd.xlane.f32.xlu0 %v1743
        %v1745 = vpop.xlane.xlu0 %1744
        %v1746 = vmul.f32 %v1745, %v334
        %v1747 = vsub.f32 %v1742, %v1746
        %v1748 = vmul.f32 %v1747, %v1747
        %v1749 = vsel %vm330, %v1748, 0.0
        %1750 = vadd.xlane.f32.xlu0 %v1749
        %v1751 = vpop.xlane.xlu0 %1750
        %v1752 = vmul.f32 %v1751, %v334
        %v1753 = vadd.f32 %v1752, 1e-05
        %v1754 = vrsqrt.pop %v1753
        %v1755 = vmul.f32 %v1747, %v1754
        %v1756 = vpack.c.bf16 %v1755, %v1755
        %v1757 = vld [vmem:[%s5] sm:$0xf]
        %v1758 = vld [vmem:[%s5 + $0x4] sm:$0xf]
        %v1759 = vld [vmem:[%s5 + $0x8] sm:$0xf]
        %v1760 = vld [vmem:[%s5 + $0xc] sm:$0xf]
        %v1761 = vld [vmem:[%s6] sm:$0x1]
        %v1763 = vlaneseq
        %v1764 = vshrl.u32 %v1763, 7
        %v1765 = vsub.s32 0, %v1764
        %v1766 = vrot.slane %v1761, %v1765
        %v1772 = vunpack.c.l.b16 %v1757
        %v1773 = vunpack.c.l.b16 %v1758
        %v1774 = vunpack.c.l.b16 %v1759
        %v1775 = vunpack.c.l.b16 %v1760
        %v1776 = vpack.c.b16 %v1773, %v1772
        %v1777 = vpack.c.b16 %v1775, %v1774
        %v1781 = vsel %vm330, %v1756, 0
        %1783 = vmatprep.subr.bf16.mxu0 0
        %1784 = vmatpush1.bf16.msra.mxu0 %v1776
        %1785 = vmatprep.subr.bf16.mxu0 0
        %1786 = vmatpush1.bf16.msra.mxu0 %v1777
        %1787 = vmatprep.subr.bf16.mxu0 0
        %1788 = vmatpush1.bf16.msra.mxu0 0
        %1789 = vmatprep.subr.bf16.mxu0 0
        %1790 = vmatpush1.bf16.msra.mxu0 0
        %1791 = vmatprep.subr.bf16.mxu0 0
        %1792 = vmatpush1.bf16.msra.mxu0 0
        %1793 = vmatprep.subr.bf16.mxu0 0
        %1794 = vmatpush1.bf16.msra.mxu0 0
        %1795 = vmatprep.subr.bf16.mxu0 0
        %1796 = vmatpush1.bf16.msra.mxu0 0
        %1797 = vmatprep.subr.bf16.mxu0 0
        %1798 = vmatpush1.bf16.msra.mxu0 0
        %1799 = vmatprep.subr.bf16.mxu0 0
        %1800 = vmatpush1.bf16.msra.mxu0 0
        %1801 = vmatprep.subr.bf16.mxu0 0
        %1802 = vmatpush1.bf16.msra.mxu0 0
        %1803 = vmatprep.subr.bf16.mxu0 0
        %1804 = vmatpush1.bf16.msra.mxu0 0
        %1805 = vmatprep.subr.bf16.mxu0 0
        %1806 = vmatpush1.bf16.msra.mxu0 0
        %1807 = vmatprep.subr.bf16.mxu0 0
        %1808 = vmatpush1.bf16.msra.mxu0 0
        %1809 = vmatprep.subr.bf16.mxu0 0
        %1810 = vmatpush1.bf16.msra.mxu0 0
        %1811 = vmatprep.subr.bf16.mxu0 0
        %1812 = vmatpush1.bf16.msra.mxu0 0
        %1813 = vmatprep.subr.bf16.mxu0 0
        %1814 = vmatpush1.bf16.msra.mxu0 0
        %1815 = vmatprep.mubr.bf16.mxu0 0
        %1816 = vmatmul.mubr.bf16.gmra.mrb[0].mxu0 %v1781
        %v1817 = vpop.f32.mrb[0].mxu0
        %v1818 = vadd.f32 %v1766, %v1817
        %v1819 = vpop.f32.mrb[0].mxu0
        %v1820 = vpop.f32.mrb[0].mxu0
        %v1821 = vpop.f32.mrb[0].mxu0
        %1822 = vdwg.mxu0
        %v1823 = vmul.f32 %v1818, 0.5
        %v1824 = vmul.f32 %v1818, 0.70710677
        %v1825 = verf.f32.pop %v1824
        %v1826 = vadd.f32 %v1825, 1.0
        %v1827 = vmul.f32 %v1823, %v1826
        %v1828 = vpack.c.bf16 %v1827, %v1827
        %v1829 = vld [vmem:[%s7] sm:$0xf]
        %v1830 = vld [vmem:[%s7 + $0x4] sm:$0xf]
        %v1831 = vld [vmem:[%s7 + $0x8] sm:$0xf]
        %v1832 = vld [vmem:[%s7 + $0xc] sm:$0xf]
        %v1833 = vld [vmem:[%s7 + $0x10] sm:$0xf]
        %v1834 = vld [vmem:[%s7 + $0x14] sm:$0xf]
        %v1835 = vld [vmem:[%s7 + $0x18] sm:$0xf]
        %v1836 = vld [vmem:[%s7 + $0x1c] sm:$0xf]
        %v1837 = vld [vmem:[%s8] sm:$0x1]
        %v1839 = vlaneseq
        %v1840 = vshrl.u32 %v1839, 7
        %v1841 = vsub.s32 0, %v1840
        %v1842 = vrot.slane %v1837, %v1841
        %v1852 = vunpack.c.l.b16 %v1829
        %v1853 = vunpack.c.l.b16 %v1830
        %v1854 = vunpack.c.l.b16 %v1831
        %v1855 = vunpack.c.l.b16 %v1832
        %v1856 = vunpack.c.l.b16 %v1833
        %v1857 = vunpack.c.l.b16 %v1834
        %v1858 = vunpack.c.l.b16 %v1835
        %v1859 = vunpack.c.l.b16 %v1836
        %v1860 = vpack.c.b16 %v1853, %v1852
        %v1861 = vpack.c.b16 %v1855, %v1854
        %v1862 = vpack.c.b16 %v1857, %v1856
        %v1863 = vpack.c.b16 %v1859, %v1858
        %vm1868 = vcmask 523264
        %v1870 = vsel %vm1868, %v1828, 0
        %1872 = vmatprep.subr.bf16.mxu0 0
        %1873 = vmatpush1.bf16.msra.mxu0 %v1860
        %1874 = vmatprep.subr.bf16.mxu0 0
        %1875 = vmatpush1.bf16.msra.mxu0 %v1861
        %1876 = vmatprep.subr.bf16.mxu0 0
        %1877 = vmatpush1.bf16.msra.mxu0 %v1862
        %1878 = vmatprep.subr.bf16.mxu0 0
        %1879 = vmatpush1.bf16.msra.mxu0 %v1863
        %1880 = vmatprep.subr.bf16.mxu0 0
        %1881 = vmatpush1.bf16.msra.mxu0 0
        %1882 = vmatprep.subr.bf16.mxu0 0
        %1883 = vmatpush1.bf16.msra.mxu0 0
        %1884 = vmatprep.subr.bf16.mxu0 0
        %1885 = vmatpush1.bf16.msra.mxu0 0
        %1886 = vmatprep.subr.bf16.mxu0 0
        %1887 = vmatpush1.bf16.msra.mxu0 0
        %1888 = vmatprep.subr.bf16.mxu0 0
        %1889 = vmatpush1.bf16.msra.mxu0 0
        %1890 = vmatprep.subr.bf16.mxu0 0
        %1891 = vmatpush1.bf16.msra.mxu0 0
        %1892 = vmatprep.subr.bf16.mxu0 0
        %1893 = vmatpush1.bf16.msra.mxu0 0
        %1894 = vmatprep.subr.bf16.mxu0 0
        %1895 = vmatpush1.bf16.msra.mxu0 0
        %1896 = vmatprep.subr.bf16.mxu0 0
        %1897 = vmatpush1.bf16.msra.mxu0 0
        %1898 = vmatprep.subr.bf16.mxu0 0
        %1899 = vmatpush1.bf16.msra.mxu0 0
        %1900 = vmatprep.subr.bf16.mxu0 0
        %1901 = vmatpush1.bf16.msra.mxu0 0
        %1902 = vmatprep.subr.bf16.mxu0 0
        %1903 = vmatpush1.bf16.msra.mxu0 0
        %1904 = vmatprep.mubr.bf16.mxu0 0
        %1905 = vmatmul.mubr.bf16.gmra.mrb[0].mxu0 %v1870
        %v1906 = vpop.f32.mrb[0].mxu0
        %v1907 = vadd.f32 %v1842, %v1906
        %v1908 = vpop.f32.mrb[0].mxu0
        %v1909 = vpop.f32.mrb[0].mxu0
        %v1910 = vpop.f32.mrb[0].mxu0
        %1911 = vdwg.mxu0
        %v1912 = vadd.f32 %v1742, %v1907
        %1913 = vst.msk [vmem:[%s323] sm:$0xff] %vm330, %v1912
        %s1914 = sand.u32 %s225, 1
        %s1915 = scalar_lea.sflag [#allocation3], %s1914
        %s1916 = sand.u32 %s225, 1
        %s1917 = smul.addr %s1916, 8
        %s1918 = scalar_lea.vmem [#allocation2], %s1917
        // Predicated region
        $region57: #{transformer_encoder_block.1} parent=55 // pred_check
          %p1919 = pneg %p235
        $region58: #{transformer_encoder_block.1} parent=55 // pred_check_branch
          %1921 = sbr.rel (%p1919) target = $region60
        $region59: #{transformer_encoder_block.1} parent=55 // pred_region
          %s1923 = ssub.s32 128, 128
          %1924 = vsyncadd %s1915, %s1923
          %s1925 = smul.addr %s23, 128
          %s1926 = scalar_lea.hbm %s9, %s1925
          %s1928 = sshll.u32 %s1918, 4
          %s1929 = int_to_ptr.vmem [resolvable:$true] %s1928
          %1931 = dma.vmem_to_hbm [thread:$0]  %s1929, 128, %s1926, %s1915
        $region60: #{transformer_encoder_block.1} parent=55 // pred_fallthru
          _
      $region56: #{transformer_encoder_block.1} parent=5 // pred_fallthru
        _
      %p1932 = scmp.le.s32.totalorder 2, %s18
      // Predicated region
      $region61: #{transformer_encoder_block.1} parent=5 // pred_check
        %p1933 = pneg %p1932
      $region62: #{transformer_encoder_block.1} parent=5 // pred_check_branch
        %1935 = sbr.rel (%p1933) target = $region64
      $region63: #{transformer_encoder_block.1} parent=5 // pred_region
        %s1936 = ssub.s32 %s18, 2
        // Predicated region
        $region65: #{transformer_encoder_block.1} parent=63 // pred_check
          %p1937 = pneg %p241
        $region66: #{transformer_encoder_block.1} parent=63 // pred_check_branch
          %1939 = sbr.rel (%p1937) target = $region68
        $region67: #{transformer_encoder_block.1} parent=63 // pred_region
          %s1940 = sand.u32 %s226, 1
          %s1941 = scalar_lea.sflag [#allocation3], %s1940
          %s1942 = sand.u32 %s226, 1
          %s1943 = smul.addr %s1942, 8
          %s1944 = scalar_lea.vmem [#allocation2], %s1943
          %1945 = dma.done %s1941, 128
        $region68: #{transformer_encoder_block.1} parent=63 // pred_fallthru
          _
      $region64: #{transformer_encoder_block.1} parent=5 // pred_fallthru
        _
    $region6: #{transformer_encoder_block.1} parent=1 // loop_footer
      %s22 = sadd.s32 1, %s18
    $region7: #{transformer_encoder_block.1} parent=1 // loop_footer_branch
      %17 = sbr.rel target = $region3
    $region8: #{transformer_encoder_block.1} parent=1 // loop_exit
      _
    %1946 = vsyncpa [#allocation3], 1
    %s1947 = scalar_lea.sflag [#allocation3], 1
    %1948 = vsyncpa %s1947, 1

</llo_original>
